<compile_context>
chip_gen: v7x
topology: tpu7x:2x2x1
jax: 0.10.0
libtpu: 0.0.40
codegen_flags: <defaults>
</compile_context>

<pallas_src>
import functools

import jax
import jax.numpy as jnp
from jax.experimental import pallas as pl
from jax.experimental.pallas import tpu as pltpu


# --------------------------------------------------------------------------
# Kernel
# --------------------------------------------------------------------------
def _cross_kernel(x_ref, wt_ref, b_ref, o_ref, *, n_layers):
    # x_ref : (TB, Dp)    batch tile (pipelined; edge block may contain garbage
    #                     rows past B -- row-wise math, masked writeback)
    # wt_ref: (L, Dp, Dp) pre-transposed weights, whole array resident in VMEM
    # b_ref : (L, 1, Dp)  biases (f32), whole array resident in VMEM
    # o_ref : (TB, Dp)
    mm_dtype = wt_ref.dtype
    # True-f32 MXU passes when weights are f32 (matches the PyTorch forward);
    # single-pass bf16 when weights were prepared in bf16.
    precision = (jax.lax.Precision.HIGHEST
                 if jnp.dtype(mm_dtype) == jnp.dtype(jnp.float32)
                 else jax.lax.Precision.DEFAULT)

    x0 = x_ref[...].astype(jnp.float32)
    x = x0
    # L is small & static -> unrolled Python loop; weights stay in VMEM.
    for i in range(n_layers):
        xw = jnp.dot(x.astype(mm_dtype), wt_ref[i],
                     preferred_element_type=jnp.float32,
                     precision=precision)          # MXU, f32 accumulate
        x = x0 * (xw + b_ref[i]) + x               # elementwise update (VPU, f32)
    o_ref[...] = x.astype(o_ref.dtype)


# --------------------------------------------------------------------------
# Parameter prep (one-time; NOT per forward pass)
# --------------------------------------------------------------------------
def _round_up(n, m):
    return ((n + m - 1) // m) * m


def prepare_cross_params(weights, biases, *, compute_dtype=jnp.float32):
    """weights: (L, D, D) in nn.Linear (out_features, in_features) layout;
    biases: (L, D).  Returns (wt, b) with wt[i] = W_i.T zero-padded to a
    lane-dense Dp (multiple of 128) in `compute_dtype` (f32 or bf16 — bf16 is
    recommended when the model tolerates it), and b as (L, 1, Dp) f32."""
    L, D, _ = weights.shape
    d_pad = _round_up(max(D, 128), 128)
    wt = jnp.transpose(weights, (0, 2, 1))                    # (L, D_in, D_out)
    if d_pad != D:
        wt = jnp.pad(wt, ((0, 0), (0, d_pad - D), (0, d_pad - D)))
        biases = jnp.pad(biases, ((0, 0), (0, d_pad - D)))
    wt = wt.astype(compute_dtype)
    b = biases.reshape(L, 1, d_pad).astype(jnp.float32)
    return wt, b


# --------------------------------------------------------------------------
# Chip / VMEM introspection (with safe fallbacks)
# --------------------------------------------------------------------------
def _device_kind():
    try:
        return jax.devices()[0].device_kind.lower()
    except Exception:
        return ""


def _num_tensorcores_per_chip():
    # Only v7x exposes 2 TensorCores per chip (where "parallel" grid sharding
    # actually buys parallelism; on v5e/v6e a split is just a serial loop).
    return 2 if "v7" in _device_kind() else 1


def _vmem_capacity_bytes():
    try:
        info = pltpu.get_tpu_info()
        cap = getattr(info, "vmem_capacity_bytes", None)
        if cap:
            return int(cap)
    except Exception:
        pass
    return (64 if "v7" in _device_kind() else 128) * 1024 * 1024


def _vmem_bytes_estimate(n_layers, d_pad, tb, w_bytes, x_bytes):
    weights = n_layers * d_pad * d_pad * w_bytes + n_layers * d_pad * 4
    tiles = 4 * tb * d_pad * x_bytes          # in + out, double-buffered
    live = 3 * tb * d_pad * 4                 # x0 / x / xw intermediates (f32)
    return weights + tiles + live


# --------------------------------------------------------------------------
# Wrapper
# --------------------------------------------------------------------------
def cross_network_v2(x, wt, b, *, tile_b=512):
    """x: (B, D); wt: (L, Dp, Dp) pre-transposed padded weights
    (from prepare_cross_params); b: (L, 1, Dp) f32.  Returns (B, D) in x.dtype."""
    B, D = x.shape
    L, d_pad, _ = wt.shape
    assert d_pad % 128 == 0 and D <= d_pad, "run prepare_cross_params first"

    w_bytes = jnp.dtype(wt.dtype).itemsize
    x_bytes = jnp.dtype(x.dtype).itemsize
    vmem_cap = _vmem_capacity_bytes()
    vmem_budget = int(0.75 * vmem_cap)

    # Batch tile: as large as reasonable (amortize the ~0.35us per-step
    # overhead, fill the MXU M dimension), shrunk until resident weights +
    # pipelined tiles + live intermediates fit the per-core VMEM budget.
    tb = min(tile_b, _round_up(B, 8))
    while tb > 8 and _vmem_bytes_estimate(L, d_pad, tb, w_bytes, x_bytes) > vmem_budget:
        tb = max(8, _round_up(tb // 2, 8))

    # Only force >=2 grid steps on 2-TensorCore parts (v7x), where the
    # "parallel" axis is actually sharded across cores.
    if _num_tensorcores_per_chip() >= 2 and B > 8 and pl.cdiv(B, tb) < 2:
        tb = max(8, _round_up(pl.cdiv(B, 2), 8))

    est = _vmem_bytes_estimate(L, d_pad, tb, w_bytes, x_bytes)
    vmem_limit = min(int(0.92 * vmem_cap), max(32 * 1024 * 1024, int(1.3 * est)))

    # Lane-pad x with zeros (exact: padded weight rows/cols and bias lanes are
    # zero, so padded lanes stay zero and are sliced off below).
    x_in = x if D == d_pad else jnp.pad(x, ((0, 0), (0, d_pad - D)))

    # Ragged batch: NO host-side row padding.  grid = cdiv(B, tb); the partial
    # edge block's extra rows are garbage on read and masked on write — safe
    # because every row is computed independently.
    grid = (pl.cdiv(B, tb),)
    kernel = functools.partial(_cross_kernel, n_layers=L)

    out = pl.pallas_call(
        kernel,
        out_shape=jax.ShapeDtypeStruct((B, d_pad), x.dtype),
        grid_spec=pltpu.PrefetchScalarGridSpec(
            num_scalar_prefetch=0,
            grid=grid,
            in_specs=[
                # x tile: pipelined over the batch grid, lane-dense full-Dp block.
                pl.BlockSpec((tb, d_pad), lambda i: (i, 0)),
                # Grid-invariant params: whole arrays, single VMEM copy
                # (no double-buffering of invariant operands).
                pl.BlockSpec(memory_space=pltpu.MemorySpace.VMEM),   # weights
                pl.BlockSpec(memory_space=pltpu.MemorySpace.VMEM),   # biases
            ],
            out_specs=pl.BlockSpec((tb, d_pad), lambda i: (i, 0)),
        ),
        compiler_params=pltpu.CompilerParams(
            dimension_semantics=("parallel",),
            vmem_limit_bytes=vmem_limit,
        ),
    )(x_in, wt, b)

    return out if D == d_pad else out[:, :D]


# --------------------------------------------------------------------------
# Pure-JAX references
# --------------------------------------------------------------------------
def cross_network_v2_ref(x, weights, biases):
    """Mirrors the PyTorch f32 forward (true-f32 matmuls)."""
    x0 = x.astype(jnp.float32)
    out = x0
    for i in range(weights.shape[0]):
        xw = jnp.dot(out, weights[i].T, precision=jax.lax.Precision.HIGHEST)
        out = x0 * (xw + biases[i]) + out
    return out


def cross_network_v2_ref_mixed(x, weights, biases, compute_dtype):
    """Reference with reduced-precision matmul operands + f32 accumulation,
    matching the kernel's bf16-weight path."""
    x0 = x.astype(jnp.float32)
    out = x0
    for i in range(weights.shape[0]):
        w = weights[i].T.astype(compute_dtype)
        xw = jnp.dot(out.astype(compute_dtype), w,
                     preferred_element_type=jnp.float32)
        out = x0 * (xw + biases[i]) + out
    return out


# --------------------------------------------------------------------------
if __name__ == "__main__":
    key = jax.random.PRNGKey(0)
    B, D, L = 64, 96, 3                       # batch, input_dim, cn_layers
    # D=96 deliberately not a multiple of 128 -> exercises the lane-padding path.

    kx, kw, kb = jax.random.split(key, 3)
    x = jax.random.normal(kx, (B, D), dtype=jnp.float32)
    # nn.Linear(D, D, bias=False) weight layout: (out_features, in_features)
    weights = jax.random.normal(kw, (L, D, D), dtype=jnp.float32) * 0.05
    # Module inits b to zeros; use small random values so the test is nontrivial.
    biases = jax.random.normal(kb, (L, D), dtype=jnp.float32) * 0.01

    # --- f32 path: matches the PyTorch forward ---
    wt32, b32 = prepare_cross_params(weights, biases, compute_dtype=jnp.float32)
    out32 = jax.block_until_ready(cross_network_v2(x, wt32, b32))
    ref32 = cross_network_v2_ref(x, weights, biases)
    assert out32.shape == (B, D)
    assert jnp.allclose(out32, ref32, atol=2e-3, rtol=2e-3), (
        f"f32 max abs err {float(jnp.max(jnp.abs(out32 - ref32)))}")

    # --- bf16-weight path: full-rate MXU, f32 accumulation + f32 update ---
    wtbf, bbf = prepare_cross_params(weights, biases, compute_dtype=jnp.bfloat16)
    outbf = jax.block_until_ready(cross_network_v2(x, wtbf, bbf))
    refbf = cross_network_v2_ref_mixed(x, weights, biases, jnp.bfloat16)
    assert jnp.allclose(outbf, refbf, atol=2e-2, rtol=2e-2), (
        f"bf16 max abs err {float(jnp.max(jnp.abs(outbf - refbf)))}")

    # --- ragged batch: partial edge block, no host-side row padding ---
    xr = x[:50]
    outr = jax.block_until_ready(cross_network_v2(xr, wt32, b32))
    refr = cross_network_v2_ref(xr, weights, biases)
    assert outr.shape == (50, D)
    assert jnp.allclose(outr, refr, atol=2e-3, rtol=2e-3), (
        f"ragged max abs err {float(jnp.max(jnp.abs(outr - refr)))}")

    print("KERNEL_OK")
</pallas_src>

<mosaic_0001>
module attributes {stable_mosaic.version = 11 : i64} {
  func.func @_cross_kernel(%arg0: i32, %arg1: memref<64x128xf32, #tpu.memory_space<vmem>>, %arg2: memref<3x128x128xf32, #tpu.memory_space<vmem>>, %arg3: memref<3x1x128xf32, #tpu.memory_space<vmem>>, %arg4: memref<64x128xf32, #tpu.memory_space<vmem>>) attributes {dimension_semantics = [#tpu.dimension_semantics<parallel>], iteration_bounds = array<i64: 1>, scalar_prefetch = 0 : i64, scratch_operands = 0 : i64, tpu.core_type = #tpu.core_type<tc>, window_params = [{transform_indices = @transform_0, window_bounds = array<i64: 64, 128>}, {pipeline_mode = #tpu.pipeline_mode<synchronous>, transform_indices = @transform_1, window_bounds = array<i64: 3, 128, 128>}, {pipeline_mode = #tpu.pipeline_mode<synchronous>, transform_indices = @transform_2, window_bounds = array<i64: 3, 1, 128>}, {transform_indices = @transform_3, window_bounds = array<i64: 64, 128>}]} {
    %c0 = arith.constant 0 : index
    %c0_0 = arith.constant 0 : index
    %0 = vector.load %arg1[%c0, %c0_0] : memref<64x128xf32, #tpu.memory_space<vmem>>, vector<64x128xf32>
    %c0_1 = arith.constant 0 : index
    %c0_2 = arith.constant 0 : index
    %c0_3 = arith.constant 0 : index
    %1 = vector.load %arg2[%c0_1, %c0_2, %c0_3] : memref<3x128x128xf32, #tpu.memory_space<vmem>>, vector<1x128x128xf32>
    %2 = vector.shape_cast %1 : vector<1x128x128xf32> to vector<128x128xf32>
    %cst = arith.constant dense<0.000000e+00> : vector<64x128xf32>
    %3 = tpu.matmul %0, %2, %cst {dimension_numbers = #tpu.dot_dimension_numbers<[1], [0], [0], [1], [0, 0, 1, 1], [], []>, precision = #tpu.contract_precision<fp32>} : vector<64x128xf32>, vector<128x128xf32>, vector<64x128xf32> -> vector<64x128xf32>
    %c0_4 = arith.constant 0 : index
    %c0_5 = arith.constant 0 : index
    %c0_6 = arith.constant 0 : index
    %4 = vector.load %arg3[%c0_4, %c0_5, %c0_6] : memref<3x1x128xf32, #tpu.memory_space<vmem>>, vector<1x1x128xf32>
    %5 = vector.shape_cast %4 : vector<1x1x128xf32> to vector<1x128xf32>
    %6 = vector.broadcast %5 : vector<1x128xf32> to vector<64x128xf32>
    %7 = arith.addf %3, %6 : vector<64x128xf32>
    %8 = arith.mulf %0, %7 : vector<64x128xf32>
    %9 = arith.addf %8, %0 : vector<64x128xf32>
    %c1 = arith.constant 1 : index
    %c0_7 = arith.constant 0 : index
    %c0_8 = arith.constant 0 : index
    %10 = vector.load %arg2[%c1, %c0_7, %c0_8] : memref<3x128x128xf32, #tpu.memory_space<vmem>>, vector<1x128x128xf32>
    %11 = vector.shape_cast %10 : vector<1x128x128xf32> to vector<128x128xf32>
    %cst_9 = arith.constant dense<0.000000e+00> : vector<64x128xf32>
    %12 = tpu.matmul %9, %11, %cst_9 {dimension_numbers = #tpu.dot_dimension_numbers<[1], [0], [0], [1], [0, 0, 1, 1], [], []>, precision = #tpu.contract_precision<fp32>} : vector<64x128xf32>, vector<128x128xf32>, vector<64x128xf32> -> vector<64x128xf32>
    %c1_10 = arith.constant 1 : index
    %c0_11 = arith.constant 0 : index
    %c0_12 = arith.constant 0 : index
    %13 = vector.load %arg3[%c1_10, %c0_11, %c0_12] : memref<3x1x128xf32, #tpu.memory_space<vmem>>, vector<1x1x128xf32>
    %14 = vector.shape_cast %13 : vector<1x1x128xf32> to vector<1x128xf32>
    %15 = vector.broadcast %14 : vector<1x128xf32> to vector<64x128xf32>
    %16 = arith.addf %12, %15 : vector<64x128xf32>
    %17 = arith.mulf %0, %16 : vector<64x128xf32>
    %18 = arith.addf %17, %9 : vector<64x128xf32>
    %c2 = arith.constant 2 : index
    %c0_13 = arith.constant 0 : index
    %c0_14 = arith.constant 0 : index
    %19 = vector.load %arg2[%c2, %c0_13, %c0_14] : memref<3x128x128xf32, #tpu.memory_space<vmem>>, vector<1x128x128xf32>
    %20 = vector.shape_cast %19 : vector<1x128x128xf32> to vector<128x128xf32>
    %cst_15 = arith.constant dense<0.000000e+00> : vector<64x128xf32>
    %21 = tpu.matmul %18, %20, %cst_15 {dimension_numbers = #tpu.dot_dimension_numbers<[1], [0], [0], [1], [0, 0, 1, 1], [], []>, precision = #tpu.contract_precision<fp32>} : vector<64x128xf32>, vector<128x128xf32>, vector<64x128xf32> -> vector<64x128xf32>
    %c2_16 = arith.constant 2 : index
    %c0_17 = arith.constant 0 : index
    %c0_18 = arith.constant 0 : index
    %22 = vector.load %arg3[%c2_16, %c0_17, %c0_18] : memref<3x1x128xf32, #tpu.memory_space<vmem>>, vector<1x1x128xf32>
    %23 = vector.shape_cast %22 : vector<1x1x128xf32> to vector<1x128xf32>
    %24 = vector.broadcast %23 : vector<1x128xf32> to vector<64x128xf32>
    %25 = arith.addf %21, %24 : vector<64x128xf32>
    %26 = arith.mulf %0, %25 : vector<64x128xf32>
    %27 = arith.addf %26, %18 : vector<64x128xf32>
    %c0_19 = arith.constant 0 : index
    %c0_20 = arith.constant 0 : index
    %28 = vector.load %arg4[%c0_19, %c0_20] : memref<64x128xf32, #tpu.memory_space<vmem>>, vector<64x128xf32>
    tpu.vector_store %arg4[%c0_19, %c0_20], %27 {strides = array<i32>} : memref<64x128xf32, #tpu.memory_space<vmem>>, vector<64x128xf32>,
    return
  }
  func.func @transform_0(%arg0: i32) -> (i32, i32) {
    %c0_i32 = arith.constant 0 : i32
    %c0_i32_0 = arith.constant 0 : i32
    return %arg0, %c0_i32 : i32, i32
  }
  func.func @transform_1(%arg0: i32) -> (i32, i32, i32) {
    %c0_i32 = arith.constant 0 : i32
    %c0_i32_0 = arith.constant 0 : i32
    %c0_i32_1 = arith.constant 0 : i32
    %c0_i32_2 = arith.constant 0 : i32
    return %c0_i32, %c0_i32_0, %c0_i32_1 : i32, i32, i32
  }
  func.func @transform_2(%arg0: i32) -> (i32, i32, i32) {
    %c0_i32 = arith.constant 0 : i32
    %c0_i32_0 = arith.constant 0 : i32
    %c0_i32_1 = arith.constant 0 : i32
    %c0_i32_2 = arith.constant 0 : i32
    return %c0_i32, %c0_i32_0, %c0_i32_1 : i32, i32, i32
  }
  func.func @transform_3(%arg0: i32) -> (i32, i32) {
    %c0_i32 = arith.constant 0 : i32
    %c0_i32_0 = arith.constant 0 : i32
    return %arg0, %c0_i32 : i32, i32
  }
}

</mosaic_0001>

<llo_original>
// kernel: tpu_custom_call.1
$region0: #{tpu_custom_call.1}
  #allocation0 [shape = 'u32[]', space=smem, size = 0x4, offset = 0x4, fixed_abs, tag = 'smem constant byte address 0x4 - core index']
  #allocation1 [shape = 'u32[144,128]{1,0:T(1,128)}', space=vmem, size = 0x12000, scoped, tag = 'internal scratch']
  %s0 = inlined_call_operand.hbm [shape: f32[64,128], index: 0, kind: input, shape index: {}]
  %s1 = inlined_call_operand.hbm [shape: f32[3,128,128], index: 1, kind: input, shape index: {}]
  %s2 = inlined_call_operand.vmem [shape: f32[3,1,128], index: 2, kind: input, shape index: {}]
  %s3 = inlined_call_operand.hbm [shape: f32[64,128], index: 3, kind: output, shape index: {}]
  %s4 = sld [smem:[#allocation0]]
  $region30: #{tpu_custom_call.1} parent=0
    _
  %s6 = ssub.s32 1, %s4
  %s7 = scalar_select 0, %s6, %s4
  $region1: #{tpu_custom_call.1} parent=0
    #allocation2 [shape = 'u8[32768]{0}', space=vmem, size = 0x8000, scoped, tag = 'input window, operand 0, single buffered']
    #allocation3 [shape = 's32[1]{0}', space=sflag, size = 0x4, scoped, tag = 'scoped memory for tpu_custom_call.1']
    #allocation4 [shape = 's32[1]{0}', space=sflag, size = 0x4, scoped, tag = 'scoped memory for tpu_custom_call.1']
    #allocation5 [shape = 'u8[196608]{0}', space=vmem, size = 0x30000, scoped, tag = 'input window, operand 1, single buffered']
    #allocation6 [shape = 's32[1]{0}', space=sflag, size = 0x4, scoped, tag = 'scoped memory for tpu_custom_call.1']
    #allocation7 [shape = 'u8[32768]{0}', space=vmem, size = 0x8000, scoped, tag = 'output window, operand 0, single buffered']
    %8 = vsyncpa [#allocation3], 0
    %9 = vsyncpa [#allocation6], 0
    %10 = vsyncpa [#allocation4], 0
    // Predicated region
    $region2: #{tpu_custom_call.1} parent=1 // pred_check
      _
    $region3: #{tpu_custom_call.1} parent=1 // pred_check_branch
      %12 = sbr.rel (0) target = $region5
    $region4: #{tpu_custom_call.1} parent=1 // pred_region
      %s14 = ssub.s32 1024, 1024
      %15 = vsyncadd [#allocation3], %s14
      %s16 = sshll.u32 [#allocation2], 4
      %s17 = int_to_ptr.vmem [resolvable:$true] %s16
      %22 = dma.hbm_to_vmem [thread:$0]  %s0, 1024, %s17, [#allocation3], 128, 128, 8
    $region5: #{tpu_custom_call.1} parent=1 // pred_fallthru
      _
    // Predicated region
    $region6: #{tpu_custom_call.1} parent=1 // pred_check
      _
    $region7: #{tpu_custom_call.1} parent=1 // pred_check_branch
      %24 = sbr.rel (0) target = $region9
    $region8: #{tpu_custom_call.1} parent=1 // pred_region
      %s26 = ssub.s32 6144, 6144
      %27 = vsyncadd [#allocation6], %s26
      %s28 = sshll.u32 [#allocation5], 4
      %s29 = int_to_ptr.vmem [resolvable:$true] %s28
      %34 = dma.hbm_to_vmem [thread:$0]  %s1, 6144, %s29, [#allocation6], 128, 128, 8
    $region9: #{tpu_custom_call.1} parent=1 // pred_fallthru
      _
    // Predicated region
    $region10: #{tpu_custom_call.1} parent=1 // pred_check
      _
    $region11: #{tpu_custom_call.1} parent=1 // pred_check_branch
      %36 = sbr.rel (0) target = $region13
    $region12: #{tpu_custom_call.1} parent=1 // pred_region
      _
    $region13: #{tpu_custom_call.1} parent=1 // pred_fallthru
      _
    // Predicated region
    $region14: #{tpu_custom_call.1} parent=1 // pred_check
      _
    $region15: #{tpu_custom_call.1} parent=1 // pred_check_branch
      %38 = sbr.rel (0) target = $region17
    $region16: #{tpu_custom_call.1} parent=1 // pred_region
      %39 = dma.done [#allocation3], 1024
    $region17: #{tpu_custom_call.1} parent=1 // pred_fallthru
      _
    // Predicated region
    $region18: #{tpu_custom_call.1} parent=1 // pred_check
      _
    $region19: #{tpu_custom_call.1} parent=1 // pred_check_branch
      %41 = sbr.rel (0) target = $region21
    $region20: #{tpu_custom_call.1} parent=1 // pred_region
      %42 = dma.done [#allocation6], 6144
    $region21: #{tpu_custom_call.1} parent=1 // pred_fallthru
      _
    %v43 = vld [vmem:[#allocation2] sm:$0xff]
    %v44 = vld [vmem:[#allocation2 + $0x8] sm:$0xff]
    %v45 = vld [vmem:[#allocation2 + $0x10] sm:$0xff]
    %v46 = vld [vmem:[#allocation2 + $0x18] sm:$0xff]
    %v47 = vld [vmem:[#allocation2 + $0x20] sm:$0xff]
    %v48 = vld [vmem:[#allocation2 + $0x28] sm:$0xff]
    %v49 = vld [vmem:[#allocation2 + $0x30] sm:$0xff]
    %v50 = vld [vmem:[#allocation2 + $0x38] sm:$0xff]
    %v51 = vld [vmem:[#allocation5] sm:$0xff]
    %v52 = vld [vmem:[#allocation5 + $0x8] sm:$0xff]
    %v53 = vld [vmem:[#allocation5 + $0x10] sm:$0xff]
    %v54 = vld [vmem:[#allocation5 + $0x18] sm:$0xff]
    %v55 = vld [vmem:[#allocation5 + $0x20] sm:$0xff]
    %v56 = vld [vmem:[#allocation5 + $0x28] sm:$0xff]
    %v57 = vld [vmem:[#allocation5 + $0x30] sm:$0xff]
    %v58 = vld [vmem:[#allocation5 + $0x38] sm:$0xff]
    %v59 = vld [vmem:[#allocation5 + $0x40] sm:$0xff]
    %v60 = vld [vmem:[#allocation5 + $0x48] sm:$0xff]
    %v61 = vld [vmem:[#allocation5 + $0x50] sm:$0xff]
    %v62 = vld [vmem:[#allocation5 + $0x58] sm:$0xff]
    %v63 = vld [vmem:[#allocation5 + $0x60] sm:$0xff]
    %v64 = vld [vmem:[#allocation5 + $0x68] sm:$0xff]
    %v65 = vld [vmem:[#allocation5 + $0x70] sm:$0xff]
    %v66 = vld [vmem:[#allocation5 + $0x78] sm:$0xff]
    %v67 = vld [vmem:[%s2] sm:$0x1]
    %v69 = vlaneseq
    %v70 = vshrl.u32 %v69, 7
    %v71 = vsub.s32 0, %v70
    %v72 = vrot.slane %v67, %v71
    %74 = vmatprep.subr.mxu0 0.0
    %v75 = vand.u32 %v51, 4294901760
    %76 = vmatpush1.msra.mxu0 %v75
    %77 = vmatprep.subr.mxu0 0.0
    %v78 = vand.u32 %v52, 4294901760
    %79 = vmatpush1.msra.mxu0 %v78
    %80 = vmatprep.subr.mxu0 0.0
    %v81 = vand.u32 %v53, 4294901760
    %82 = vmatpush1.msra.mxu0 %v81
    %83 = vmatprep.subr.mxu0 0.0
    %v84 = vand.u32 %v54, 4294901760
    %85 = vmatpush1.msra.mxu0 %v84
    %86 = vmatprep.subr.mxu0 0.0
    %v87 = vand.u32 %v55, 4294901760
    %88 = vmatpush1.msra.mxu0 %v87
    %89 = vmatprep.subr.mxu0 0.0
    %v90 = vand.u32 %v56, 4294901760
    %91 = vmatpush1.msra.mxu0 %v90
    %92 = vmatprep.subr.mxu0 0.0
    %v93 = vand.u32 %v57, 4294901760
    %94 = vmatpush1.msra.mxu0 %v93
    %95 = vmatprep.subr.mxu0 0.0
    %v96 = vand.u32 %v58, 4294901760
    %97 = vmatpush1.msra.mxu0 %v96
    %98 = vmatprep.subr.mxu0 0.0
    %v99 = vand.u32 %v59, 4294901760
    %100 = vmatpush1.msra.mxu0 %v99
    %101 = vmatprep.subr.mxu0 0.0
    %v102 = vand.u32 %v60, 4294901760
    %103 = vmatpush1.msra.mxu0 %v102
    %104 = vmatprep.subr.mxu0 0.0
    %v105 = vand.u32 %v61, 4294901760
    %106 = vmatpush1.msra.mxu0 %v105
    %107 = vmatprep.subr.mxu0 0.0
    %v108 = vand.u32 %v62, 4294901760
    %109 = vmatpush1.msra.mxu0 %v108
    %110 = vmatprep.subr.mxu0 0.0
    %v111 = vand.u32 %v63, 4294901760
    %112 = vmatpush1.msra.mxu0 %v111
    %113 = vmatprep.subr.mxu0 0.0
    %v114 = vand.u32 %v64, 4294901760
    %115 = vmatpush1.msra.mxu0 %v114
    %116 = vmatprep.subr.mxu0 0.0
    %v117 = vand.u32 %v65, 4294901760
    %118 = vmatpush1.msra.mxu0 %v117
    %119 = vmatprep.subr.mxu0 0.0
    %v120 = vand.u32 %v66, 4294901760
    %121 = vmatpush1.msra.mxu0 %v120
    %122 = vmatprep.subr.mxu0 0.0
    %123 = vmatpush1.msra.mxu0 0.0
    %124 = vmatprep.subr.mxu0 0.0
    %125 = vmatpush1.msra.mxu0 0.0
    %126 = vmatprep.subr.mxu0 0.0
    %127 = vmatpush1.msra.mxu0 0.0
    %128 = vmatprep.subr.mxu0 0.0
    %129 = vmatpush1.msra.mxu0 0.0
    %130 = vmatprep.subr.mxu0 0.0
    %131 = vmatpush1.msra.mxu0 0.0
    %132 = vmatprep.subr.mxu0 0.0
    %133 = vmatpush1.msra.mxu0 0.0
    %134 = vmatprep.subr.mxu0 0.0
    %135 = vmatpush1.msra.mxu0 0.0
    %136 = vmatprep.subr.mxu0 0.0
    %137 = vmatpush1.msra.mxu0 0.0
    %138 = vmatprep.subr.mxu0 0.0
    %139 = vmatpush1.msra.mxu0 0.0
    %140 = vmatprep.subr.mxu0 0.0
    %141 = vmatpush1.msra.mxu0 0.0
    %142 = vmatprep.subr.mxu0 0.0
    %143 = vmatpush1.msra.mxu0 0.0
    %144 = vmatprep.subr.mxu0 0.0
    %145 = vmatpush1.msra.mxu0 0.0
    %146 = vmatprep.subr.mxu0 0.0
    %147 = vmatpush1.msra.mxu0 0.0
    %148 = vmatprep.subr.mxu0 0.0
    %149 = vmatpush1.msra.mxu0 0.0
    %150 = vmatprep.subr.mxu0 0.0
    %151 = vmatpush1.msra.mxu0 0.0
    %152 = vmatprep.subr.mxu0 0.0
    %153 = vmatpush1.msra.mxu0 0.0
    %154 = vmatprep.mubr.f32.mxu0 0.0
    %v155 = vand.u32 %v43, 4294901760
    %v156 = vsub.f32 %v43, %v155
    %v157 = vand.u32 %v156, 4294901760
    %v158 = vsub.f32 %v156, %v157
    %v159 = vand.u32 %v158, 4294901760
    %160 = vmatmul.mubr.f32.gmra.mrb[0].mxu0 %v159
    %v161 = vpop.f32.mrb[0].mxu0
    %v162 = vadd.f32 %v72, %v161
    %v163 = vpop.f32.mrb[0].mxu0
    %164 = vmatprep.mubr.f32.mxu0 0.0
    %v165 = vand.u32 %v44, 4294901760
    %v166 = vsub.f32 %v44, %v165
    %v167 = vand.u32 %v166, 4294901760
    %v168 = vsub.f32 %v166, %v167
    %v169 = vand.u32 %v168, 4294901760
    %170 = vmatmul.mubr.f32.gmra.mrb[0].mxu0 %v169
    %v171 = vpop.f32.mrb[0].mxu0
    %v172 = vadd.f32 %v72, %v171
    %v173 = vpop.f32.mrb[0].mxu0
    %174 = vmatprep.mubr.f32.mxu0 0.0
    %v175 = vand.u32 %v45, 4294901760
    %v176 = vsub.f32 %v45, %v175
    %v177 = vand.u32 %v176, 4294901760
    %v178 = vsub.f32 %v176, %v177
    %v179 = vand.u32 %v178, 4294901760
    %180 = vmatmul.mubr.f32.gmra.mrb[0].mxu0 %v179
    %v181 = vpop.f32.mrb[0].mxu0
    %v182 = vadd.f32 %v72, %v181
    %v183 = vpop.f32.mrb[0].mxu0
    %184 = vmatprep.mubr.f32.mxu0 0.0
    %v185 = vand.u32 %v46, 4294901760
    %v186 = vsub.f32 %v46, %v185
    %v187 = vand.u32 %v186, 4294901760
    %v188 = vsub.f32 %v186, %v187
    %v189 = vand.u32 %v188, 4294901760
    %190 = vmatmul.mubr.f32.gmra.mrb[0].mxu0 %v189
    %v191 = vpop.f32.mrb[0].mxu0
    %v192 = vadd.f32 %v72, %v191
    %v193 = vpop.f32.mrb[0].mxu0
    %194 = vmatprep.mubr.f32.mxu0 0.0
    %v195 = vand.u32 %v47, 4294901760
    %v196 = vsub.f32 %v47, %v195
    %v197 = vand.u32 %v196, 4294901760
    %v198 = vsub.f32 %v196, %v197
    %v199 = vand.u32 %v198, 4294901760
    %200 = vmatmul.mubr.f32.gmra.mrb[0].mxu0 %v199
    %v201 = vpop.f32.mrb[0].mxu0
    %v202 = vadd.f32 %v72, %v201
    %v203 = vpop.f32.mrb[0].mxu0
    %204 = vmatprep.mubr.f32.mxu0 0.0
    %v205 = vand.u32 %v48, 4294901760
    %v206 = vsub.f32 %v48, %v205
    %v207 = vand.u32 %v206, 4294901760
    %v208 = vsub.f32 %v206, %v207
    %v209 = vand.u32 %v208, 4294901760
    %210 = vmatmul.mubr.f32.gmra.mrb[0].mxu0 %v209
    %v211 = vpop.f32.mrb[0].mxu0
    %v212 = vadd.f32 %v72, %v211
    %v213 = vpop.f32.mrb[0].mxu0
    %214 = vmatprep.mubr.f32.mxu0 0.0
    %v215 = vand.u32 %v49, 4294901760
    %v216 = vsub.f32 %v49, %v215
    %v217 = vand.u32 %v216, 4294901760
    %v218 = vsub.f32 %v216, %v217
    %v219 = vand.u32 %v218, 4294901760
    %220 = vmatmul.mubr.f32.gmra.mrb[0].mxu0 %v219
    %v221 = vpop.f32.mrb[0].mxu0
    %v222 = vadd.f32 %v72, %v221
    %v223 = vpop.f32.mrb[0].mxu0
    %224 = vmatprep.mubr.f32.mxu0 0.0
    %v225 = vand.u32 %v50, 4294901760
    %v226 = vsub.f32 %v50, %v225
    %v227 = vand.u32 %v226, 4294901760
    %v228 = vsub.f32 %v226, %v227
    %v229 = vand.u32 %v228, 4294901760
    %230 = vmatmul.mubr.f32.gmra.mrb[0].mxu0 %v229
    %v231 = vpop.f32.mrb[0].mxu0
    %v232 = vadd.f32 %v72, %v231
    %v233 = vpop.f32.mrb[0].mxu0
    %234 = vdwg.mxu0
    %235 = vmatprep.subr.mxu0 0.0
    %v236 = vand.u32 %v51, 4294901760
    %v237 = vsub.f32 %v51, %v236
    %v238 = vand.u32 %v237, 4294901760
    %v239 = vsub.f32 %v237, %v238
    %v240 = vand.u32 %v239, 4294901760
    %241 = vmatpush1.msra.mxu0 %v240
    %242 = vmatprep.subr.mxu0 0.0
    %v243 = vand.u32 %v52, 4294901760
    %v244 = vsub.f32 %v52, %v243
    %v245 = vand.u32 %v244, 4294901760
    %v246 = vsub.f32 %v244, %v245
    %v247 = vand.u32 %v246, 4294901760
    %248 = vmatpush1.msra.mxu0 %v247
    %249 = vmatprep.subr.mxu0 0.0
    %v250 = vand.u32 %v53, 4294901760
    %v251 = vsub.f32 %v53, %v250
    %v252 = vand.u32 %v251, 4294901760
    %v253 = vsub.f32 %v251, %v252
    %v254 = vand.u32 %v253, 4294901760
    %255 = vmatpush1.msra.mxu0 %v254
    %256 = vmatprep.subr.mxu0 0.0
    %v257 = vand.u32 %v54, 4294901760
    %v258 = vsub.f32 %v54, %v257
    %v259 = vand.u32 %v258, 4294901760
    %v260 = vsub.f32 %v258, %v259
    %v261 = vand.u32 %v260, 4294901760
    %262 = vmatpush1.msra.mxu0 %v261
    %263 = vmatprep.subr.mxu0 0.0
    %v264 = vand.u32 %v55, 4294901760
    %v265 = vsub.f32 %v55, %v264
    %v266 = vand.u32 %v265, 4294901760
    %v267 = vsub.f32 %v265, %v266
    %v268 = vand.u32 %v267, 4294901760
    %269 = vmatpush1.msra.mxu0 %v268
    %270 = vmatprep.subr.mxu0 0.0
    %v271 = vand.u32 %v56, 4294901760
    %v272 = vsub.f32 %v56, %v271
    %v273 = vand.u32 %v272, 4294901760
    %v274 = vsub.f32 %v272, %v273
    %v275 = vand.u32 %v274, 4294901760
    %276 = vmatpush1.msra.mxu0 %v275
    %277 = vmatprep.subr.mxu0 0.0
    %v278 = vand.u32 %v57, 4294901760
    %v279 = vsub.f32 %v57, %v278
    %v280 = vand.u32 %v279, 4294901760
    %v281 = vsub.f32 %v279, %v280
    %v282 = vand.u32 %v281, 4294901760
    %283 = vmatpush1.msra.mxu0 %v282
    %284 = vmatprep.subr.mxu0 0.0
    %v285 = vand.u32 %v58, 4294901760
    %v286 = vsub.f32 %v58, %v285
    %v287 = vand.u32 %v286, 4294901760
    %v288 = vsub.f32 %v286, %v287
    %v289 = vand.u32 %v288, 4294901760
    %290 = vmatpush1.msra.mxu0 %v289
    %291 = vmatprep.subr.mxu0 0.0
    %v292 = vand.u32 %v59, 4294901760
    %v293 = vsub.f32 %v59, %v292
    %v294 = vand.u32 %v293, 4294901760
    %v295 = vsub.f32 %v293, %v294
    %v296 = vand.u32 %v295, 4294901760
    %297 = vmatpush1.msra.mxu0 %v296
    %298 = vmatprep.subr.mxu0 0.0
    %v299 = vand.u32 %v60, 4294901760
    %v300 = vsub.f32 %v60, %v299
    %v301 = vand.u32 %v300, 4294901760
    %v302 = vsub.f32 %v300, %v301
    %v303 = vand.u32 %v302, 4294901760
    %304 = vmatpush1.msra.mxu0 %v303
    %305 = vmatprep.subr.mxu0 0.0
    %v306 = vand.u32 %v61, 4294901760
    %v307 = vsub.f32 %v61, %v306
    %v308 = vand.u32 %v307, 4294901760
    %v309 = vsub.f32 %v307, %v308
    %v310 = vand.u32 %v309, 4294901760
    %311 = vmatpush1.msra.mxu0 %v310
    %312 = vmatprep.subr.mxu0 0.0
    %v313 = vand.u32 %v62, 4294901760
    %v314 = vsub.f32 %v62, %v313
    %v315 = vand.u32 %v314, 4294901760
    %v316 = vsub.f32 %v314, %v315
    %v317 = vand.u32 %v316, 4294901760
    %318 = vmatpush1.msra.mxu0 %v317
    %319 = vmatprep.subr.mxu0 0.0
    %v320 = vand.u32 %v63, 4294901760
    %v321 = vsub.f32 %v63, %v320
    %v322 = vand.u32 %v321, 4294901760
    %v323 = vsub.f32 %v321, %v322
    %v324 = vand.u32 %v323, 4294901760
    %325 = vmatpush1.msra.mxu0 %v324
    %326 = vmatprep.subr.mxu0 0.0
    %v327 = vand.u32 %v64, 4294901760
    %v328 = vsub.f32 %v64, %v327
    %v329 = vand.u32 %v328, 4294901760
    %v330 = vsub.f32 %v328, %v329
    %v331 = vand.u32 %v330, 4294901760
    %332 = vmatpush1.msra.mxu0 %v331
    %333 = vmatprep.subr.mxu0 0.0
    %v334 = vand.u32 %v65, 4294901760
    %v335 = vsub.f32 %v65, %v334
    %v336 = vand.u32 %v335, 4294901760
    %v337 = vsub.f32 %v335, %v336
    %v338 = vand.u32 %v337, 4294901760
    %339 = vmatpush1.msra.mxu0 %v338
    %340 = vmatprep.subr.mxu0 0.0
    %v341 = vand.u32 %v66, 4294901760
    %v342 = vsub.f32 %v66, %v341
    %v343 = vand.u32 %v342, 4294901760
    %v344 = vsub.f32 %v342, %v343
    %v345 = vand.u32 %v344, 4294901760
    %346 = vmatpush1.msra.mxu0 %v345
    %347 = vmatprep.subr.mxu0 0.0
    %348 = vmatpush1.msra.mxu0 0.0
    %349 = vmatprep.subr.mxu0 0.0
    %350 = vmatpush1.msra.mxu0 0.0
    %351 = vmatprep.subr.mxu0 0.0
    %352 = vmatpush1.msra.mxu0 0.0
    %353 = vmatprep.subr.mxu0 0.0
    %354 = vmatpush1.msra.mxu0 0.0
    %355 = vmatprep.subr.mxu0 0.0
    %356 = vmatpush1.msra.mxu0 0.0
    %357 = vmatprep.subr.mxu0 0.0
    %358 = vmatpush1.msra.mxu0 0.0
    %359 = vmatprep.subr.mxu0 0.0
    %360 = vmatpush1.msra.mxu0 0.0
    %361 = vmatprep.subr.mxu0 0.0
    %362 = vmatpush1.msra.mxu0 0.0
    %363 = vmatprep.subr.mxu0 0.0
    %364 = vmatpush1.msra.mxu0 0.0
    %365 = vmatprep.subr.mxu0 0.0
    %366 = vmatpush1.msra.mxu0 0.0
    %367 = vmatprep.subr.mxu0 0.0
    %368 = vmatpush1.msra.mxu0 0.0
    %369 = vmatprep.subr.mxu0 0.0
    %370 = vmatpush1.msra.mxu0 0.0
    %371 = vmatprep.subr.mxu0 0.0
    %372 = vmatpush1.msra.mxu0 0.0
    %373 = vmatprep.subr.mxu0 0.0
    %374 = vmatpush1.msra.mxu0 0.0
    %375 = vmatprep.subr.mxu0 0.0
    %376 = vmatpush1.msra.mxu0 0.0
    %377 = vmatprep.subr.mxu0 0.0
    %378 = vmatpush1.msra.mxu0 0.0
    %379 = vmatprep.mubr.f32.mxu0 0.0
    %v380 = vand.u32 %v43, 4294901760
    %381 = vmatmul.mubr.f32.gmra.mrb[0].mxu0 %v380
    %v382 = vpop.f32.mrb[0].mxu0
    %v383 = vadd.f32 %v162, %v382
    %v384 = vpop.f32.mrb[0].mxu0
    %385 = vmatprep.mubr.f32.mxu0 0.0
    %v386 = vand.u32 %v44, 4294901760
    %387 = vmatmul.mubr.f32.gmra.mrb[0].mxu0 %v386
    %v388 = vpop.f32.mrb[0].mxu0
    %v389 = vadd.f32 %v172, %v388
    %v390 = vpop.f32.mrb[0].mxu0
    %391 = vmatprep.mubr.f32.mxu0 0.0
    %v392 = vand.u32 %v45, 4294901760
    %393 = vmatmul.mubr.f32.gmra.mrb[0].mxu0 %v392
    %v394 = vpop.f32.mrb[0].mxu0
    %v395 = vadd.f32 %v182, %v394
    %v396 = vpop.f32.mrb[0].mxu0
    %397 = vmatprep.mubr.f32.mxu0 0.0
    %v398 = vand.u32 %v46, 4294901760
    %399 = vmatmul.mubr.f32.gmra.mrb[0].mxu0 %v398
    %v400 = vpop.f32.mrb[0].mxu0
    %v401 = vadd.f32 %v192, %v400
    %v402 = vpop.f32.mrb[0].mxu0
    %403 = vmatprep.mubr.f32.mxu0 0.0
    %v404 = vand.u32 %v47, 4294901760
    %405 = vmatmul.mubr.f32.gmra.mrb[0].mxu0 %v404
    %v406 = vpop.f32.mrb[0].mxu0
    %v407 = vadd.f32 %v202, %v406
    %v408 = vpop.f32.mrb[0].mxu0
    %409 = vmatprep.mubr.f32.mxu0 0.0
    %v410 = vand.u32 %v48, 4294901760
    %411 = vmatmul.mubr.f32.gmra.mrb[0].mxu0 %v410
    %v412 = vpop.f32.mrb[0].mxu0
    %v413 = vadd.f32 %v212, %v412
    %v414 = vpop.f32.mrb[0].mxu0
    %415 = vmatprep.mubr.f32.mxu0 0.0
    %v416 = vand.u32 %v49, 4294901760
    %417 = vmatmul.mubr.f32.gmra.mrb[0].mxu0 %v416
    %v418 = vpop.f32.mrb[0].mxu0
    %v419 = vadd.f32 %v222, %v418
    %v420 = vpop.f32.mrb[0].mxu0
    %421 = vmatprep.mubr.f32.mxu0 0.0
    %v422 = vand.u32 %v50, 4294901760
    %423 = vmatmul.mubr.f32.gmra.mrb[0].mxu0 %v422
    %v424 = vpop.f32.mrb[0].mxu0
    %v425 = vadd.f32 %v232, %v424
    %v426 = vpop.f32.mrb[0].mxu0
    %427 = vdwg.mxu0
    %428 = vmatprep.subr.mxu0 0.0
    %v429 = vand.u32 %v51, 4294901760
    %v430 = vsub.f32 %v51, %v429
    %431 = vmatpush1.msra.mxu0 %v430
    %432 = vmatprep.subr.mxu0 0.0
    %v433 = vand.u32 %v52, 4294901760
    %v434 = vsub.f32 %v52, %v433
    %435 = vmatpush1.msra.mxu0 %v434
    %436 = vmatprep.subr.mxu0 0.0
    %v437 = vand.u32 %v53, 4294901760
    %v438 = vsub.f32 %v53, %v437
    %439 = vmatpush1.msra.mxu0 %v438
    %440 = vmatprep.subr.mxu0 0.0
    %v441 = vand.u32 %v54, 4294901760
    %v442 = vsub.f32 %v54, %v441
    %443 = vmatpush1.msra.mxu0 %v442
    %444 = vmatprep.subr.mxu0 0.0
    %v445 = vand.u32 %v55, 4294901760
    %v446 = vsub.f32 %v55, %v445
    %447 = vmatpush1.msra.mxu0 %v446
    %448 = vmatprep.subr.mxu0 0.0
    %v449 = vand.u32 %v56, 4294901760
    %v450 = vsub.f32 %v56, %v449
    %451 = vmatpush1.msra.mxu0 %v450
    %452 = vmatprep.subr.mxu0 0.0
    %v453 = vand.u32 %v57, 4294901760
    %v454 = vsub.f32 %v57, %v453
    %455 = vmatpush1.msra.mxu0 %v454
    %456 = vmatprep.subr.mxu0 0.0
    %v457 = vand.u32 %v58, 4294901760
    %v458 = vsub.f32 %v58, %v457
    %459 = vmatpush1.msra.mxu0 %v458
    %460 = vmatprep.subr.mxu0 0.0
    %v461 = vand.u32 %v59, 4294901760
    %v462 = vsub.f32 %v59, %v461
    %463 = vmatpush1.msra.mxu0 %v462
    %464 = vmatprep.subr.mxu0 0.0
    %v465 = vand.u32 %v60, 4294901760
    %v466 = vsub.f32 %v60, %v465
    %467 = vmatpush1.msra.mxu0 %v466
    %468 = vmatprep.subr.mxu0 0.0
    %v469 = vand.u32 %v61, 4294901760
    %v470 = vsub.f32 %v61, %v469
    %471 = vmatpush1.msra.mxu0 %v470
    %472 = vmatprep.subr.mxu0 0.0
    %v473 = vand.u32 %v62, 4294901760
    %v474 = vsub.f32 %v62, %v473
    %475 = vmatpush1.msra.mxu0 %v474
    %476 = vmatprep.subr.mxu0 0.0
    %v477 = vand.u32 %v63, 4294901760
    %v478 = vsub.f32 %v63, %v477
    %479 = vmatpush1.msra.mxu0 %v478
    %480 = vmatprep.subr.mxu0 0.0
    %v481 = vand.u32 %v64, 4294901760
    %v482 = vsub.f32 %v64, %v481
    %483 = vmatpush1.msra.mxu0 %v482
    %484 = vmatprep.subr.mxu0 0.0
    %v485 = vand.u32 %v65, 4294901760
    %v486 = vsub.f32 %v65, %v485
    %487 = vmatpush1.msra.mxu0 %v486
    %488 = vmatprep.subr.mxu0 0.0
    %v489 = vand.u32 %v66, 4294901760
    %v490 = vsub.f32 %v66, %v489
    %491 = vmatpush1.msra.mxu0 %v490
    %492 = vmatprep.subr.mxu0 0.0
    %493 = vmatpush1.msra.mxu0 0.0
    %494 = vmatprep.subr.mxu0 0.0
    %495 = vmatpush1.msra.mxu0 0.0
    %496 = vmatprep.subr.mxu0 0.0
    %497 = vmatpush1.msra.mxu0 0.0
    %498 = vmatprep.subr.mxu0 0.0
    %499 = vmatpush1.msra.mxu0 0.0
    %500 = vmatprep.subr.mxu0 0.0
    %501 = vmatpush1.msra.mxu0 0.0
    %502 = vmatprep.subr.mxu0 0.0
    %503 = vmatpush1.msra.mxu0 0.0
    %504 = vmatprep.subr.mxu0 0.0
    %505 = vmatpush1.msra.mxu0 0.0
    %506 = vmatprep.subr.mxu0 0.0
    %507 = vmatpush1.msra.mxu0 0.0
    %508 = vmatprep.subr.mxu0 0.0
    %509 = vmatpush1.msra.mxu0 0.0
    %510 = vmatprep.subr.mxu0 0.0
    %511 = vmatpush1.msra.mxu0 0.0
    %512 = vmatprep.subr.mxu0 0.0
    %513 = vmatpush1.msra.mxu0 0.0
    %514 = vmatprep.subr.mxu0 0.0
    %515 = vmatpush1.msra.mxu0 0.0
    %516 = vmatprep.subr.mxu0 0.0
    %517 = vmatpush1.msra.mxu0 0.0
    %518 = vmatprep.subr.mxu0 0.0
    %519 = vmatpush1.msra.mxu0 0.0
    %520 = vmatprep.subr.mxu0 0.0
    %521 = vmatpush1.msra.mxu0 0.0
    %522 = vmatprep.subr.mxu0 0.0
    %523 = vmatpush1.msra.mxu0 0.0
    %524 = vmatprep.mubr.f32.mxu0 0.0
    %v525 = vand.u32 %v43, 4294901760
    %v526 = vsub.f32 %v43, %v525
    %527 = vmatmul.mubr.f32.gmra.mrb[0].mxu0 %v526
    %v528 = vpop.f32.mrb[0].mxu0
    %v529 = vadd.f32 %v383, %v528
    %v530 = vpop.f32.mrb[0].mxu0
    %531 = vmatprep.mubr.f32.mxu0 0.0
    %v532 = vand.u32 %v44, 4294901760
    %v533 = vsub.f32 %v44, %v532
    %534 = vmatmul.mubr.f32.gmra.mrb[0].mxu0 %v533
    %v535 = vpop.f32.mrb[0].mxu0
    %v536 = vadd.f32 %v389, %v535
    %v537 = vpop.f32.mrb[0].mxu0
    %538 = vmatprep.mubr.f32.mxu0 0.0
    %v539 = vand.u32 %v45, 4294901760
    %v540 = vsub.f32 %v45, %v539
    %541 = vmatmul.mubr.f32.gmra.mrb[0].mxu0 %v540
    %v542 = vpop.f32.mrb[0].mxu0
    %v543 = vadd.f32 %v395, %v542
    %v544 = vpop.f32.mrb[0].mxu0
    %545 = vmatprep.mubr.f32.mxu0 0.0
    %v546 = vand.u32 %v46, 4294901760
    %v547 = vsub.f32 %v46, %v546
    %548 = vmatmul.mubr.f32.gmra.mrb[0].mxu0 %v547
    %v549 = vpop.f32.mrb[0].mxu0
    %v550 = vadd.f32 %v401, %v549
    %v551 = vpop.f32.mrb[0].mxu0
    %552 = vmatprep.mubr.f32.mxu0 0.0
    %v553 = vand.u32 %v47, 4294901760
    %v554 = vsub.f32 %v47, %v553
    %555 = vmatmul.mubr.f32.gmra.mrb[0].mxu0 %v554
    %v556 = vpop.f32.mrb[0].mxu0
    %v557 = vadd.f32 %v407, %v556
    %v558 = vpop.f32.mrb[0].mxu0
    %559 = vmatprep.mubr.f32.mxu0 0.0
    %v560 = vand.u32 %v48, 4294901760
    %v561 = vsub.f32 %v48, %v560
    %562 = vmatmul.mubr.f32.gmra.mrb[0].mxu0 %v561
    %v563 = vpop.f32.mrb[0].mxu0
    %v564 = vadd.f32 %v413, %v563
    %v565 = vpop.f32.mrb[0].mxu0
    %566 = vmatprep.mubr.f32.mxu0 0.0
    %v567 = vand.u32 %v49, 4294901760
    %v568 = vsub.f32 %v49, %v567
    %569 = vmatmul.mubr.f32.gmra.mrb[0].mxu0 %v568
    %v570 = vpop.f32.mrb[0].mxu0
    %v571 = vadd.f32 %v419, %v570
    %v572 = vpop.f32.mrb[0].mxu0
    %573 = vmatprep.mubr.f32.mxu0 0.0
    %v574 = vand.u32 %v50, 4294901760
    %v575 = vsub.f32 %v50, %v574
    %576 = vmatmul.mubr.f32.gmra.mrb[0].mxu0 %v575
    %v577 = vpop.f32.mrb[0].mxu0
    %v578 = vadd.f32 %v425, %v577
    %v579 = vpop.f32.mrb[0].mxu0
    %580 = vdwg.mxu0
    %581 = vmatprep.subr.mxu0 0.0
    %v582 = vand.u32 %v51, 4294901760
    %583 = vmatpush1.msra.mxu0 %v582
    %584 = vmatprep.subr.mxu0 0.0
    %v585 = vand.u32 %v52, 4294901760
    %586 = vmatpush1.msra.mxu0 %v585
    %587 = vmatprep.subr.mxu0 0.0
    %v588 = vand.u32 %v53, 4294901760
    %589 = vmatpush1.msra.mxu0 %v588
    %590 = vmatprep.subr.mxu0 0.0
    %v591 = vand.u32 %v54, 4294901760
    %592 = vmatpush1.msra.mxu0 %v591
    %593 = vmatprep.subr.mxu0 0.0
    %v594 = vand.u32 %v55, 4294901760
    %595 = vmatpush1.msra.mxu0 %v594
    %596 = vmatprep.subr.mxu0 0.0
    %v597 = vand.u32 %v56, 4294901760
    %598 = vmatpush1.msra.mxu0 %v597
    %599 = vmatprep.subr.mxu0 0.0
    %v600 = vand.u32 %v57, 4294901760
    %601 = vmatpush1.msra.mxu0 %v600
    %602 = vmatprep.subr.mxu0 0.0
    %v603 = vand.u32 %v58, 4294901760
    %604 = vmatpush1.msra.mxu0 %v603
    %605 = vmatprep.subr.mxu0 0.0
    %v606 = vand.u32 %v59, 4294901760
    %607 = vmatpush1.msra.mxu0 %v606
    %608 = vmatprep.subr.mxu0 0.0
    %v609 = vand.u32 %v60, 4294901760
    %610 = vmatpush1.msra.mxu0 %v609
    %611 = vmatprep.subr.mxu0 0.0
    %v612 = vand.u32 %v61, 4294901760
    %613 = vmatpush1.msra.mxu0 %v612
    %614 = vmatprep.subr.mxu0 0.0
    %v615 = vand.u32 %v62, 4294901760
    %616 = vmatpush1.msra.mxu0 %v615
    %617 = vmatprep.subr.mxu0 0.0
    %v618 = vand.u32 %v63, 4294901760
    %619 = vmatpush1.msra.mxu0 %v618
    %620 = vmatprep.subr.mxu0 0.0
    %v621 = vand.u32 %v64, 4294901760
    %622 = vmatpush1.msra.mxu0 %v621
    %623 = vmatprep.subr.mxu0 0.0
    %v624 = vand.u32 %v65, 4294901760
    %625 = vmatpush1.msra.mxu0 %v624
    %626 = vmatprep.subr.mxu0 0.0
    %v627 = vand.u32 %v66, 4294901760
    %628 = vmatpush1.msra.mxu0 %v627
    %629 = vmatprep.subr.mxu0 0.0
    %630 = vmatpush1.msra.mxu0 0.0
    %631 = vmatprep.subr.mxu0 0.0
    %632 = vmatpush1.msra.mxu0 0.0
    %633 = vmatprep.subr.mxu0 0.0
    %634 = vmatpush1.msra.mxu0 0.0
    %635 = vmatprep.subr.mxu0 0.0
    %636 = vmatpush1.msra.mxu0 0.0
    %637 = vmatprep.subr.mxu0 0.0
    %638 = vmatpush1.msra.mxu0 0.0
    %639 = vmatprep.subr.mxu0 0.0
    %640 = vmatpush1.msra.mxu0 0.0
    %641 = vmatprep.subr.mxu0 0.0
    %642 = vmatpush1.msra.mxu0 0.0
    %643 = vmatprep.subr.mxu0 0.0
    %644 = vmatpush1.msra.mxu0 0.0
    %645 = vmatprep.subr.mxu0 0.0
    %646 = vmatpush1.msra.mxu0 0.0
    %647 = vmatprep.subr.mxu0 0.0
    %648 = vmatpush1.msra.mxu0 0.0
    %649 = vmatprep.subr.mxu0 0.0
    %650 = vmatpush1.msra.mxu0 0.0
    %651 = vmatprep.subr.mxu0 0.0
    %652 = vmatpush1.msra.mxu0 0.0
    %653 = vmatprep.subr.mxu0 0.0
    %654 = vmatpush1.msra.mxu0 0.0
    %655 = vmatprep.subr.mxu0 0.0
    %656 = vmatpush1.msra.mxu0 0.0
    %657 = vmatprep.subr.mxu0 0.0
    %658 = vmatpush1.msra.mxu0 0.0
    %659 = vmatprep.subr.mxu0 0.0
    %660 = vmatpush1.msra.mxu0 0.0
    %661 = vmatprep.mubr.f32.mxu0 0.0
    %v662 = vand.u32 %v43, 4294901760
    %v663 = vsub.f32 %v43, %v662
    %v664 = vand.u32 %v663, 4294901760
    %665 = vmatmul.mubr.f32.gmra.mrb[0].mxu0 %v664
    %v666 = vpop.f32.mrb[0].mxu0
    %v667 = vadd.f32 %v529, %v666
    %v668 = vpop.f32.mrb[0].mxu0
    %669 = vmatprep.mubr.f32.mxu0 0.0
    %v670 = vand.u32 %v44, 4294901760
    %v671 = vsub.f32 %v44, %v670
    %v672 = vand.u32 %v671, 4294901760
    %673 = vmatmul.mubr.f32.gmra.mrb[0].mxu0 %v672
    %v674 = vpop.f32.mrb[0].mxu0
    %v675 = vadd.f32 %v536, %v674
    %v676 = vpop.f32.mrb[0].mxu0
    %677 = vmatprep.mubr.f32.mxu0 0.0
    %v678 = vand.u32 %v45, 4294901760
    %v679 = vsub.f32 %v45, %v678
    %v680 = vand.u32 %v679, 4294901760
    %681 = vmatmul.mubr.f32.gmra.mrb[0].mxu0 %v680
    %v682 = vpop.f32.mrb[0].mxu0
    %v683 = vadd.f32 %v543, %v682
    %v684 = vpop.f32.mrb[0].mxu0
    %685 = vmatprep.mubr.f32.mxu0 0.0
    %v686 = vand.u32 %v46, 4294901760
    %v687 = vsub.f32 %v46, %v686
    %v688 = vand.u32 %v687, 4294901760
    %689 = vmatmul.mubr.f32.gmra.mrb[0].mxu0 %v688
    %v690 = vpop.f32.mrb[0].mxu0
    %v691 = vadd.f32 %v550, %v690
    %v692 = vpop.f32.mrb[0].mxu0
    %693 = vmatprep.mubr.f32.mxu0 0.0
    %v694 = vand.u32 %v47, 4294901760
    %v695 = vsub.f32 %v47, %v694
    %v696 = vand.u32 %v695, 4294901760
    %697 = vmatmul.mubr.f32.gmra.mrb[0].mxu0 %v696
    %v698 = vpop.f32.mrb[0].mxu0
    %v699 = vadd.f32 %v557, %v698
    %v700 = vpop.f32.mrb[0].mxu0
    %701 = vmatprep.mubr.f32.mxu0 0.0
    %v702 = vand.u32 %v48, 4294901760
    %v703 = vsub.f32 %v48, %v702
    %v704 = vand.u32 %v703, 4294901760
    %705 = vmatmul.mubr.f32.gmra.mrb[0].mxu0 %v704
    %v706 = vpop.f32.mrb[0].mxu0
    %v707 = vadd.f32 %v564, %v706
    %v708 = vpop.f32.mrb[0].mxu0
    %709 = vmatprep.mubr.f32.mxu0 0.0
    %v710 = vand.u32 %v49, 4294901760
    %v711 = vsub.f32 %v49, %v710
    %v712 = vand.u32 %v711, 4294901760
    %713 = vmatmul.mubr.f32.gmra.mrb[0].mxu0 %v712
    %v714 = vpop.f32.mrb[0].mxu0
    %v715 = vadd.f32 %v571, %v714
    %v716 = vpop.f32.mrb[0].mxu0
    %717 = vmatprep.mubr.f32.mxu0 0.0
    %v718 = vand.u32 %v50, 4294901760
    %v719 = vsub.f32 %v50, %v718
    %v720 = vand.u32 %v719, 4294901760
    %721 = vmatmul.mubr.f32.gmra.mrb[0].mxu0 %v720
    %v722 = vpop.f32.mrb[0].mxu0
    %v723 = vadd.f32 %v578, %v722
    %v724 = vpop.f32.mrb[0].mxu0
    %725 = vdwg.mxu0
    %726 = vmatprep.subr.mxu0 0.0
    %v727 = vand.u32 %v51, 4294901760
    %v728 = vsub.f32 %v51, %v727
    %v729 = vand.u32 %v728, 4294901760
    %730 = vmatpush1.msra.mxu0 %v729
    %731 = vmatprep.subr.mxu0 0.0
    %v732 = vand.u32 %v52, 4294901760
    %v733 = vsub.f32 %v52, %v732
    %v734 = vand.u32 %v733, 4294901760
    %735 = vmatpush1.msra.mxu0 %v734
    %736 = vmatprep.subr.mxu0 0.0
    %v737 = vand.u32 %v53, 4294901760
    %v738 = vsub.f32 %v53, %v737
    %v739 = vand.u32 %v738, 4294901760
    %740 = vmatpush1.msra.mxu0 %v739
    %741 = vmatprep.subr.mxu0 0.0
    %v742 = vand.u32 %v54, 4294901760
    %v743 = vsub.f32 %v54, %v742
    %v744 = vand.u32 %v743, 4294901760
    %745 = vmatpush1.msra.mxu0 %v744
    %746 = vmatprep.subr.mxu0 0.0
    %v747 = vand.u32 %v55, 4294901760
    %v748 = vsub.f32 %v55, %v747
    %v749 = vand.u32 %v748, 4294901760
    %750 = vmatpush1.msra.mxu0 %v749
    %751 = vmatprep.subr.mxu0 0.0
    %v752 = vand.u32 %v56, 4294901760
    %v753 = vsub.f32 %v56, %v752
    %v754 = vand.u32 %v753, 4294901760
    %755 = vmatpush1.msra.mxu0 %v754
    %756 = vmatprep.subr.mxu0 0.0
    %v757 = vand.u32 %v57, 4294901760
    %v758 = vsub.f32 %v57, %v757
    %v759 = vand.u32 %v758, 4294901760
    %760 = vmatpush1.msra.mxu0 %v759
    %761 = vmatprep.subr.mxu0 0.0
    %v762 = vand.u32 %v58, 4294901760
    %v763 = vsub.f32 %v58, %v762
    %v764 = vand.u32 %v763, 4294901760
    %765 = vmatpush1.msra.mxu0 %v764
    %766 = vmatprep.subr.mxu0 0.0
    %v767 = vand.u32 %v59, 4294901760
    %v768 = vsub.f32 %v59, %v767
    %v769 = vand.u32 %v768, 4294901760
    %770 = vmatpush1.msra.mxu0 %v769
    %771 = vmatprep.subr.mxu0 0.0
    %v772 = vand.u32 %v60, 4294901760
    %v773 = vsub.f32 %v60, %v772
    %v774 = vand.u32 %v773, 4294901760
    %775 = vmatpush1.msra.mxu0 %v774
    %776 = vmatprep.subr.mxu0 0.0
    %v777 = vand.u32 %v61, 4294901760
    %v778 = vsub.f32 %v61, %v777
    %v779 = vand.u32 %v778, 4294901760
    %780 = vmatpush1.msra.mxu0 %v779
    %781 = vmatprep.subr.mxu0 0.0
    %v782 = vand.u32 %v62, 4294901760
    %v783 = vsub.f32 %v62, %v782
    %v784 = vand.u32 %v783, 4294901760
    %785 = vmatpush1.msra.mxu0 %v784
    %786 = vmatprep.subr.mxu0 0.0
    %v787 = vand.u32 %v63, 4294901760
    %v788 = vsub.f32 %v63, %v787
    %v789 = vand.u32 %v788, 4294901760
    %790 = vmatpush1.msra.mxu0 %v789
    %791 = vmatprep.subr.mxu0 0.0
    %v792 = vand.u32 %v64, 4294901760
    %v793 = vsub.f32 %v64, %v792
    %v794 = vand.u32 %v793, 4294901760
    %795 = vmatpush1.msra.mxu0 %v794
    %796 = vmatprep.subr.mxu0 0.0
    %v797 = vand.u32 %v65, 4294901760
    %v798 = vsub.f32 %v65, %v797
    %v799 = vand.u32 %v798, 4294901760
    %800 = vmatpush1.msra.mxu0 %v799
    %801 = vmatprep.subr.mxu0 0.0
    %v802 = vand.u32 %v66, 4294901760
    %v803 = vsub.f32 %v66, %v802
    %v804 = vand.u32 %v803, 4294901760
    %805 = vmatpush1.msra.mxu0 %v804
    %806 = vmatprep.subr.mxu0 0.0
    %807 = vmatpush1.msra.mxu0 0.0
    %808 = vmatprep.subr.mxu0 0.0
    %809 = vmatpush1.msra.mxu0 0.0
    %810 = vmatprep.subr.mxu0 0.0
    %811 = vmatpush1.msra.mxu0 0.0
    %812 = vmatprep.subr.mxu0 0.0
    %813 = vmatpush1.msra.mxu0 0.0
    %814 = vmatprep.subr.mxu0 0.0
    %815 = vmatpush1.msra.mxu0 0.0
    %816 = vmatprep.subr.mxu0 0.0
    %817 = vmatpush1.msra.mxu0 0.0
    %818 = vmatprep.subr.mxu0 0.0
    %819 = vmatpush1.msra.mxu0 0.0
    %820 = vmatprep.subr.mxu0 0.0
    %821 = vmatpush1.msra.mxu0 0.0
    %822 = vmatprep.subr.mxu0 0.0
    %823 = vmatpush1.msra.mxu0 0.0
    %824 = vmatprep.subr.mxu0 0.0
    %825 = vmatpush1.msra.mxu0 0.0
    %826 = vmatprep.subr.mxu0 0.0
    %827 = vmatpush1.msra.mxu0 0.0
    %828 = vmatprep.subr.mxu0 0.0
    %829 = vmatpush1.msra.mxu0 0.0
    %830 = vmatprep.subr.mxu0 0.0
    %831 = vmatpush1.msra.mxu0 0.0
    %832 = vmatprep.subr.mxu0 0.0
    %833 = vmatpush1.msra.mxu0 0.0
    %834 = vmatprep.subr.mxu0 0.0
    %835 = vmatpush1.msra.mxu0 0.0
    %836 = vmatprep.subr.mxu0 0.0
    %837 = vmatpush1.msra.mxu0 0.0
    %838 = vmatprep.mubr.f32.mxu0 0.0
    %v839 = vand.u32 %v43, 4294901760
    %840 = vmatmul.mubr.f32.gmra.mrb[0].mxu0 %v839
    %v841 = vpop.f32.mrb[0].mxu0
    %v842 = vadd.f32 %v667, %v841
    %v843 = vpop.f32.mrb[0].mxu0
    %844 = vmatprep.mubr.f32.mxu0 0.0
    %v845 = vand.u32 %v44, 4294901760
    %846 = vmatmul.mubr.f32.gmra.mrb[0].mxu0 %v845
    %v847 = vpop.f32.mrb[0].mxu0
    %v848 = vadd.f32 %v675, %v847
    %v849 = vpop.f32.mrb[0].mxu0
    %850 = vmatprep.mubr.f32.mxu0 0.0
    %v851 = vand.u32 %v45, 4294901760
    %852 = vmatmul.mubr.f32.gmra.mrb[0].mxu0 %v851
    %v853 = vpop.f32.mrb[0].mxu0
    %v854 = vadd.f32 %v683, %v853
    %v855 = vpop.f32.mrb[0].mxu0
    %856 = vmatprep.mubr.f32.mxu0 0.0
    %v857 = vand.u32 %v46, 4294901760
    %858 = vmatmul.mubr.f32.gmra.mrb[0].mxu0 %v857
    %v859 = vpop.f32.mrb[0].mxu0
    %v860 = vadd.f32 %v691, %v859
    %v861 = vpop.f32.mrb[0].mxu0
    %862 = vmatprep.mubr.f32.mxu0 0.0
    %v863 = vand.u32 %v47, 4294901760
    %864 = vmatmul.mubr.f32.gmra.mrb[0].mxu0 %v863
    %v865 = vpop.f32.mrb[0].mxu0
    %v866 = vadd.f32 %v699, %v865
    %v867 = vpop.f32.mrb[0].mxu0
    %868 = vmatprep.mubr.f32.mxu0 0.0
    %v869 = vand.u32 %v48, 4294901760
    %870 = vmatmul.mubr.f32.gmra.mrb[0].mxu0 %v869
    %v871 = vpop.f32.mrb[0].mxu0
    %v872 = vadd.f32 %v707, %v871
    %v873 = vpop.f32.mrb[0].mxu0
    %874 = vmatprep.mubr.f32.mxu0 0.0
    %v875 = vand.u32 %v49, 4294901760
    %876 = vmatmul.mubr.f32.gmra.mrb[0].mxu0 %v875
    %v877 = vpop.f32.mrb[0].mxu0
    %v878 = vadd.f32 %v715, %v877
    %v879 = vpop.f32.mrb[0].mxu0
    %880 = vmatprep.mubr.f32.mxu0 0.0
    %v881 = vand.u32 %v50, 4294901760
    %882 = vmatmul.mubr.f32.gmra.mrb[0].mxu0 %v881
    %v883 = vpop.f32.mrb[0].mxu0
    %v884 = vadd.f32 %v723, %v883
    %v885 = vpop.f32.mrb[0].mxu0
    %886 = vdwg.mxu0
    %887 = vmatprep.subr.mxu0 0.0
    %v888 = vand.u32 %v51, 4294901760
    %889 = vmatpush1.msra.mxu0 %v888
    %890 = vmatprep.subr.mxu0 0.0
    %v891 = vand.u32 %v52, 4294901760
    %892 = vmatpush1.msra.mxu0 %v891
    %893 = vmatprep.subr.mxu0 0.0
    %v894 = vand.u32 %v53, 4294901760
    %895 = vmatpush1.msra.mxu0 %v894
    %896 = vmatprep.subr.mxu0 0.0
    %v897 = vand.u32 %v54, 4294901760
    %898 = vmatpush1.msra.mxu0 %v897
    %899 = vmatprep.subr.mxu0 0.0
    %v900 = vand.u32 %v55, 4294901760
    %901 = vmatpush1.msra.mxu0 %v900
    %902 = vmatprep.subr.mxu0 0.0
    %v903 = vand.u32 %v56, 4294901760
    %904 = vmatpush1.msra.mxu0 %v903
    %905 = vmatprep.subr.mxu0 0.0
    %v906 = vand.u32 %v57, 4294901760
    %907 = vmatpush1.msra.mxu0 %v906
    %908 = vmatprep.subr.mxu0 0.0
    %v909 = vand.u32 %v58, 4294901760
    %910 = vmatpush1.msra.mxu0 %v909
    %911 = vmatprep.subr.mxu0 0.0
    %v912 = vand.u32 %v59, 4294901760
    %913 = vmatpush1.msra.mxu0 %v912
    %914 = vmatprep.subr.mxu0 0.0
    %v915 = vand.u32 %v60, 4294901760
    %916 = vmatpush1.msra.mxu0 %v915
    %917 = vmatprep.subr.mxu0 0.0
    %v918 = vand.u32 %v61, 4294901760
    %919 = vmatpush1.msra.mxu0 %v918
    %920 = vmatprep.subr.mxu0 0.0
    %v921 = vand.u32 %v62, 4294901760
    %922 = vmatpush1.msra.mxu0 %v921
    %923 = vmatprep.subr.mxu0 0.0
    %v924 = vand.u32 %v63, 4294901760
    %925 = vmatpush1.msra.mxu0 %v924
    %926 = vmatprep.subr.mxu0 0.0
    %v927 = vand.u32 %v64, 4294901760
    %928 = vmatpush1.msra.mxu0 %v927
    %929 = vmatprep.subr.mxu0 0.0
    %v930 = vand.u32 %v65, 4294901760
    %931 = vmatpush1.msra.mxu0 %v930
    %932 = vmatprep.subr.mxu0 0.0
    %v933 = vand.u32 %v66, 4294901760
    %934 = vmatpush1.msra.mxu0 %v933
    %935 = vmatprep.subr.mxu0 0.0
    %936 = vmatpush1.msra.mxu0 0.0
    %937 = vmatprep.subr.mxu0 0.0
    %938 = vmatpush1.msra.mxu0 0.0
    %939 = vmatprep.subr.mxu0 0.0
    %940 = vmatpush1.msra.mxu0 0.0
    %941 = vmatprep.subr.mxu0 0.0
    %942 = vmatpush1.msra.mxu0 0.0
    %943 = vmatprep.subr.mxu0 0.0
    %944 = vmatpush1.msra.mxu0 0.0
    %945 = vmatprep.subr.mxu0 0.0
    %946 = vmatpush1.msra.mxu0 0.0
    %947 = vmatprep.subr.mxu0 0.0
    %948 = vmatpush1.msra.mxu0 0.0
    %949 = vmatprep.subr.mxu0 0.0
    %950 = vmatpush1.msra.mxu0 0.0
    %951 = vmatprep.subr.mxu0 0.0
    %952 = vmatpush1.msra.mxu0 0.0
    %953 = vmatprep.subr.mxu0 0.0
    %954 = vmatpush1.msra.mxu0 0.0
    %955 = vmatprep.subr.mxu0 0.0
    %956 = vmatpush1.msra.mxu0 0.0
    %957 = vmatprep.subr.mxu0 0.0
    %958 = vmatpush1.msra.mxu0 0.0
    %959 = vmatprep.subr.mxu0 0.0
    %960 = vmatpush1.msra.mxu0 0.0
    %961 = vmatprep.subr.mxu0 0.0
    %962 = vmatpush1.msra.mxu0 0.0
    %963 = vmatprep.subr.mxu0 0.0
    %964 = vmatpush1.msra.mxu0 0.0
    %965 = vmatprep.subr.mxu0 0.0
    %966 = vmatpush1.msra.mxu0 0.0
    %967 = vmatprep.mubr.f32.mxu0 0.0
    %v968 = vand.u32 %v43, 4294901760
    %969 = vmatmul.mubr.f32.gmra.mrb[0].mxu0 %v968
    %v970 = vpop.f32.mrb[0].mxu0
    %v971 = vadd.f32 %v842, %v970
    %v972 = vpop.f32.mrb[0].mxu0
    %973 = vmatprep.mubr.f32.mxu0 0.0
    %v974 = vand.u32 %v44, 4294901760
    %975 = vmatmul.mubr.f32.gmra.mrb[0].mxu0 %v974
    %v976 = vpop.f32.mrb[0].mxu0
    %v977 = vadd.f32 %v848, %v976
    %v978 = vpop.f32.mrb[0].mxu0
    %979 = vmatprep.mubr.f32.mxu0 0.0
    %v980 = vand.u32 %v45, 4294901760
    %981 = vmatmul.mubr.f32.gmra.mrb[0].mxu0 %v980
    %v982 = vpop.f32.mrb[0].mxu0
    %v983 = vadd.f32 %v854, %v982
    %v984 = vpop.f32.mrb[0].mxu0
    %985 = vmatprep.mubr.f32.mxu0 0.0
    %v986 = vand.u32 %v46, 4294901760
    %987 = vmatmul.mubr.f32.gmra.mrb[0].mxu0 %v986
    %v988 = vpop.f32.mrb[0].mxu0
    %v989 = vadd.f32 %v860, %v988
    %v990 = vpop.f32.mrb[0].mxu0
    %991 = vmatprep.mubr.f32.mxu0 0.0
    %v992 = vand.u32 %v47, 4294901760
    %993 = vmatmul.mubr.f32.gmra.mrb[0].mxu0 %v992
    %v994 = vpop.f32.mrb[0].mxu0
    %v995 = vadd.f32 %v866, %v994
    %v996 = vpop.f32.mrb[0].mxu0
    %997 = vmatprep.mubr.f32.mxu0 0.0
    %v998 = vand.u32 %v48, 4294901760
    %999 = vmatmul.mubr.f32.gmra.mrb[0].mxu0 %v998
    %v1000 = vpop.f32.mrb[0].mxu0
    %v1001 = vadd.f32 %v872, %v1000
    %v1002 = vpop.f32.mrb[0].mxu0
    %1003 = vmatprep.mubr.f32.mxu0 0.0
    %v1004 = vand.u32 %v49, 4294901760
    %1005 = vmatmul.mubr.f32.gmra.mrb[0].mxu0 %v1004
    %v1006 = vpop.f32.mrb[0].mxu0
    %v1007 = vadd.f32 %v878, %v1006
    %v1008 = vpop.f32.mrb[0].mxu0
    %1009 = vmatprep.mubr.f32.mxu0 0.0
    %v1010 = vand.u32 %v50, 4294901760
    %1011 = vmatmul.mubr.f32.gmra.mrb[0].mxu0 %v1010
    %v1012 = vpop.f32.mrb[0].mxu0
    %v1013 = vadd.f32 %v884, %v1012
    %v1014 = vpop.f32.mrb[0].mxu0
    %1015 = vdwg.mxu0
    %v1016 = vmul.f32 %v43, %v971
    %v1017 = vmul.f32 %v44, %v977
    %v1018 = vmul.f32 %v45, %v983
    %v1019 = vmul.f32 %v46, %v989
    %v1020 = vmul.f32 %v47, %v995
    %v1021 = vmul.f32 %v48, %v1001
    %v1022 = vmul.f32 %v49, %v1007
    %v1023 = vmul.f32 %v50, %v1013
    %v1024 = vadd.f32 %v1016, %v43
    %v1025 = vadd.f32 %v1017, %v44
    %v1026 = vadd.f32 %v1018, %v45
    %v1027 = vadd.f32 %v1019, %v46
    %v1028 = vadd.f32 %v1020, %v47
    %v1029 = vadd.f32 %v1021, %v48
    %v1030 = vadd.f32 %v1022, %v49
    %v1031 = vadd.f32 %v1023, %v50
    %s1032 = scalar_lea.vmem [#allocation5], 128
    %v1033 = vld [vmem:[%s1032] sm:$0xff]
    %v1034 = vld [vmem:[%s1032 + $0x8] sm:$0xff]
    %v1035 = vld [vmem:[%s1032 + $0x10] sm:$0xff]
    %v1036 = vld [vmem:[%s1032 + $0x18] sm:$0xff]
    %v1037 = vld [vmem:[%s1032 + $0x20] sm:$0xff]
    %v1038 = vld [vmem:[%s1032 + $0x28] sm:$0xff]
    %v1039 = vld [vmem:[%s1032 + $0x30] sm:$0xff]
    %v1040 = vld [vmem:[%s1032 + $0x38] sm:$0xff]
    %v1041 = vld [vmem:[%s1032 + $0x40] sm:$0xff]
    %v1042 = vld [vmem:[%s1032 + $0x48] sm:$0xff]
    %v1043 = vld [vmem:[%s1032 + $0x50] sm:$0xff]
    %v1044 = vld [vmem:[%s1032 + $0x58] sm:$0xff]
    %v1045 = vld [vmem:[%s1032 + $0x60] sm:$0xff]
    %v1046 = vld [vmem:[%s1032 + $0x68] sm:$0xff]
    %v1047 = vld [vmem:[%s1032 + $0x70] sm:$0xff]
    %v1048 = vld [vmem:[%s1032 + $0x78] sm:$0xff]
    %s1049 = scalar_lea.vmem %s2, 1
    %v1050 = vld [vmem:[%s1049] sm:$0x1]
    %v1052 = vlaneseq
    %v1053 = vshrl.u32 %v1052, 7
    %v1054 = vsub.s32 0, %v1053
    %v1055 = vrot.slane %v1050, %v1054
    %1057 = vmatprep.subr.mxu0 0.0
    %v1058 = vand.u32 %v1033, 4294901760
    %1059 = vmatpush1.msra.mxu0 %v1058
    %1060 = vmatprep.subr.mxu0 0.0
    %v1061 = vand.u32 %v1034, 4294901760
    %1062 = vmatpush1.msra.mxu0 %v1061
    %1063 = vmatprep.subr.mxu0 0.0
    %v1064 = vand.u32 %v1035, 4294901760
    %1065 = vmatpush1.msra.mxu0 %v1064
    %1066 = vmatprep.subr.mxu0 0.0
    %v1067 = vand.u32 %v1036, 4294901760
    %1068 = vmatpush1.msra.mxu0 %v1067
    %1069 = vmatprep.subr.mxu0 0.0
    %v1070 = vand.u32 %v1037, 4294901760
    %1071 = vmatpush1.msra.mxu0 %v1070
    %1072 = vmatprep.subr.mxu0 0.0
    %v1073 = vand.u32 %v1038, 4294901760
    %1074 = vmatpush1.msra.mxu0 %v1073
    %1075 = vmatprep.subr.mxu0 0.0
    %v1076 = vand.u32 %v1039, 4294901760
    %1077 = vmatpush1.msra.mxu0 %v1076
    %1078 = vmatprep.subr.mxu0 0.0
    %v1079 = vand.u32 %v1040, 4294901760
    %1080 = vmatpush1.msra.mxu0 %v1079
    %1081 = vmatprep.subr.mxu0 0.0
    %v1082 = vand.u32 %v1041, 4294901760
    %1083 = vmatpush1.msra.mxu0 %v1082
    %1084 = vmatprep.subr.mxu0 0.0
    %v1085 = vand.u32 %v1042, 4294901760
    %1086 = vmatpush1.msra.mxu0 %v1085
    %1087 = vmatprep.subr.mxu0 0.0
    %v1088 = vand.u32 %v1043, 4294901760
    %1089 = vmatpush1.msra.mxu0 %v1088
    %1090 = vmatprep.subr.mxu0 0.0
    %v1091 = vand.u32 %v1044, 4294901760
    %1092 = vmatpush1.msra.mxu0 %v1091
    %1093 = vmatprep.subr.mxu0 0.0
    %v1094 = vand.u32 %v1045, 4294901760
    %1095 = vmatpush1.msra.mxu0 %v1094
    %1096 = vmatprep.subr.mxu0 0.0
    %v1097 = vand.u32 %v1046, 4294901760
    %1098 = vmatpush1.msra.mxu0 %v1097
    %1099 = vmatprep.subr.mxu0 0.0
    %v1100 = vand.u32 %v1047, 4294901760
    %1101 = vmatpush1.msra.mxu0 %v1100
    %1102 = vmatprep.subr.mxu0 0.0
    %v1103 = vand.u32 %v1048, 4294901760
    %1104 = vmatpush1.msra.mxu0 %v1103
    %1105 = vmatprep.subr.mxu0 0.0
    %1106 = vmatpush1.msra.mxu0 0.0
    %1107 = vmatprep.subr.mxu0 0.0
    %1108 = vmatpush1.msra.mxu0 0.0
    %1109 = vmatprep.subr.mxu0 0.0
    %1110 = vmatpush1.msra.mxu0 0.0
    %1111 = vmatprep.subr.mxu0 0.0
    %1112 = vmatpush1.msra.mxu0 0.0
    %1113 = vmatprep.subr.mxu0 0.0
    %1114 = vmatpush1.msra.mxu0 0.0
    %1115 = vmatprep.subr.mxu0 0.0
    %1116 = vmatpush1.msra.mxu0 0.0
    %1117 = vmatprep.subr.mxu0 0.0
    %1118 = vmatpush1.msra.mxu0 0.0
    %1119 = vmatprep.subr.mxu0 0.0
    %1120 = vmatpush1.msra.mxu0 0.0
    %1121 = vmatprep.subr.mxu0 0.0
    %1122 = vmatpush1.msra.mxu0 0.0
    %1123 = vmatprep.subr.mxu0 0.0
    %1124 = vmatpush1.msra.mxu0 0.0
    %1125 = vmatprep.subr.mxu0 0.0
    %1126 = vmatpush1.msra.mxu0 0.0
    %1127 = vmatprep.subr.mxu0 0.0
    %1128 = vmatpush1.msra.mxu0 0.0
    %1129 = vmatprep.subr.mxu0 0.0
    %1130 = vmatpush1.msra.mxu0 0.0
    %1131 = vmatprep.subr.mxu0 0.0
    %1132 = vmatpush1.msra.mxu0 0.0
    %1133 = vmatprep.subr.mxu0 0.0
    %1134 = vmatpush1.msra.mxu0 0.0
    %1135 = vmatprep.subr.mxu0 0.0
    %1136 = vmatpush1.msra.mxu0 0.0
    %1137 = vmatprep.mubr.f32.mxu0 0.0
    %v1138 = vand.u32 %v1024, 4294901760
    %v1139 = vsub.f32 %v1024, %v1138
    %v1140 = vand.u32 %v1139, 4294901760
    %v1141 = vsub.f32 %v1139, %v1140
    %v1142 = vand.u32 %v1141, 4294901760
    %1143 = vmatmul.mubr.f32.gmra.mrb[0].mxu0 %v1142
    %v1144 = vpop.f32.mrb[0].mxu0
    %v1145 = vadd.f32 %v1055, %v1144
    %v1146 = vpop.f32.mrb[0].mxu0
    %1147 = vmatprep.mubr.f32.mxu0 0.0
    %v1148 = vand.u32 %v1025, 4294901760
    %v1149 = vsub.f32 %v1025, %v1148
    %v1150 = vand.u32 %v1149, 4294901760
    %v1151 = vsub.f32 %v1149, %v1150
    %v1152 = vand.u32 %v1151, 4294901760
    %1153 = vmatmul.mubr.f32.gmra.mrb[0].mxu0 %v1152
    %v1154 = vpop.f32.mrb[0].mxu0
    %v1155 = vadd.f32 %v1055, %v1154
    %v1156 = vpop.f32.mrb[0].mxu0
    %1157 = vmatprep.mubr.f32.mxu0 0.0
    %v1158 = vand.u32 %v1026, 4294901760
    %v1159 = vsub.f32 %v1026, %v1158
    %v1160 = vand.u32 %v1159, 4294901760
    %v1161 = vsub.f32 %v1159, %v1160
    %v1162 = vand.u32 %v1161, 4294901760
    %1163 = vmatmul.mubr.f32.gmra.mrb[0].mxu0 %v1162
    %v1164 = vpop.f32.mrb[0].mxu0
    %v1165 = vadd.f32 %v1055, %v1164
    %v1166 = vpop.f32.mrb[0].mxu0
    %1167 = vmatprep.mubr.f32.mxu0 0.0
    %v1168 = vand.u32 %v1027, 4294901760
    %v1169 = vsub.f32 %v1027, %v1168
    %v1170 = vand.u32 %v1169, 4294901760
    %v1171 = vsub.f32 %v1169, %v1170
    %v1172 = vand.u32 %v1171, 4294901760
    %1173 = vmatmul.mubr.f32.gmra.mrb[0].mxu0 %v1172
    %v1174 = vpop.f32.mrb[0].mxu0
    %v1175 = vadd.f32 %v1055, %v1174
    %v1176 = vpop.f32.mrb[0].mxu0
    %1177 = vmatprep.mubr.f32.mxu0 0.0
    %v1178 = vand.u32 %v1028, 4294901760
    %v1179 = vsub.f32 %v1028, %v1178
    %v1180 = vand.u32 %v1179, 4294901760
    %v1181 = vsub.f32 %v1179, %v1180
    %v1182 = vand.u32 %v1181, 4294901760
    %1183 = vmatmul.mubr.f32.gmra.mrb[0].mxu0 %v1182
    %v1184 = vpop.f32.mrb[0].mxu0
    %v1185 = vadd.f32 %v1055, %v1184
    %v1186 = vpop.f32.mrb[0].mxu0
    %1187 = vmatprep.mubr.f32.mxu0 0.0
    %v1188 = vand.u32 %v1029, 4294901760
    %v1189 = vsub.f32 %v1029, %v1188
    %v1190 = vand.u32 %v1189, 4294901760
    %v1191 = vsub.f32 %v1189, %v1190
    %v1192 = vand.u32 %v1191, 4294901760
    %1193 = vmatmul.mubr.f32.gmra.mrb[0].mxu0 %v1192
    %v1194 = vpop.f32.mrb[0].mxu0
    %v1195 = vadd.f32 %v1055, %v1194
    %v1196 = vpop.f32.mrb[0].mxu0
    %1197 = vmatprep.mubr.f32.mxu0 0.0
    %v1198 = vand.u32 %v1030, 4294901760
    %v1199 = vsub.f32 %v1030, %v1198
    %v1200 = vand.u32 %v1199, 4294901760
    %v1201 = vsub.f32 %v1199, %v1200
    %v1202 = vand.u32 %v1201, 4294901760
    %1203 = vmatmul.mubr.f32.gmra.mrb[0].mxu0 %v1202
    %v1204 = vpop.f32.mrb[0].mxu0
    %v1205 = vadd.f32 %v1055, %v1204
    %v1206 = vpop.f32.mrb[0].mxu0
    %1207 = vmatprep.mubr.f32.mxu0 0.0
    %v1208 = vand.u32 %v1031, 4294901760
    %v1209 = vsub.f32 %v1031, %v1208
    %v1210 = vand.u32 %v1209, 4294901760
    %v1211 = vsub.f32 %v1209, %v1210
    %v1212 = vand.u32 %v1211, 4294901760
    %1213 = vmatmul.mubr.f32.gmra.mrb[0].mxu0 %v1212
    %v1214 = vpop.f32.mrb[0].mxu0
    %v1215 = vadd.f32 %v1055, %v1214
    %v1216 = vpop.f32.mrb[0].mxu0
    %1217 = vdwg.mxu0
    %1218 = vmatprep.subr.mxu0 0.0
    %v1219 = vand.u32 %v1033, 4294901760
    %v1220 = vsub.f32 %v1033, %v1219
    %v1221 = vand.u32 %v1220, 4294901760
    %v1222 = vsub.f32 %v1220, %v1221
    %v1223 = vand.u32 %v1222, 4294901760
    %1224 = vmatpush1.msra.mxu0 %v1223
    %1225 = vmatprep.subr.mxu0 0.0
    %v1226 = vand.u32 %v1034, 4294901760
    %v1227 = vsub.f32 %v1034, %v1226
    %v1228 = vand.u32 %v1227, 4294901760
    %v1229 = vsub.f32 %v1227, %v1228
    %v1230 = vand.u32 %v1229, 4294901760
    %1231 = vmatpush1.msra.mxu0 %v1230
    %1232 = vmatprep.subr.mxu0 0.0
    %v1233 = vand.u32 %v1035, 4294901760
    %v1234 = vsub.f32 %v1035, %v1233
    %v1235 = vand.u32 %v1234, 4294901760
    %v1236 = vsub.f32 %v1234, %v1235
    %v1237 = vand.u32 %v1236, 4294901760
    %1238 = vmatpush1.msra.mxu0 %v1237
    %1239 = vmatprep.subr.mxu0 0.0
    %v1240 = vand.u32 %v1036, 4294901760
    %v1241 = vsub.f32 %v1036, %v1240
    %v1242 = vand.u32 %v1241, 4294901760
    %v1243 = vsub.f32 %v1241, %v1242
    %v1244 = vand.u32 %v1243, 4294901760
    %1245 = vmatpush1.msra.mxu0 %v1244
    %1246 = vmatprep.subr.mxu0 0.0
    %v1247 = vand.u32 %v1037, 4294901760
    %v1248 = vsub.f32 %v1037, %v1247
    %v1249 = vand.u32 %v1248, 4294901760
    %v1250 = vsub.f32 %v1248, %v1249
    %v1251 = vand.u32 %v1250, 4294901760
    %1252 = vmatpush1.msra.mxu0 %v1251
    %1253 = vmatprep.subr.mxu0 0.0
    %v1254 = vand.u32 %v1038, 4294901760
    %v1255 = vsub.f32 %v1038, %v1254
    %v1256 = vand.u32 %v1255, 4294901760
    %v1257 = vsub.f32 %v1255, %v1256
    %v1258 = vand.u32 %v1257, 4294901760
    %1259 = vmatpush1.msra.mxu0 %v1258
    %1260 = vmatprep.subr.mxu0 0.0
    %v1261 = vand.u32 %v1039, 4294901760
    %v1262 = vsub.f32 %v1039, %v1261
    %v1263 = vand.u32 %v1262, 4294901760
    %v1264 = vsub.f32 %v1262, %v1263
    %v1265 = vand.u32 %v1264, 4294901760
    %1266 = vmatpush1.msra.mxu0 %v1265
    %1267 = vmatprep.subr.mxu0 0.0
    %v1268 = vand.u32 %v1040, 4294901760
    %v1269 = vsub.f32 %v1040, %v1268
    %v1270 = vand.u32 %v1269, 4294901760
    %v1271 = vsub.f32 %v1269, %v1270
    %v1272 = vand.u32 %v1271, 4294901760
    %1273 = vmatpush1.msra.mxu0 %v1272
    %1274 = vmatprep.subr.mxu0 0.0
    %v1275 = vand.u32 %v1041, 4294901760
    %v1276 = vsub.f32 %v1041, %v1275
    %v1277 = vand.u32 %v1276, 4294901760
    %v1278 = vsub.f32 %v1276, %v1277
    %v1279 = vand.u32 %v1278, 4294901760
    %1280 = vmatpush1.msra.mxu0 %v1279
    %1281 = vmatprep.subr.mxu0 0.0
    %v1282 = vand.u32 %v1042, 4294901760
    %v1283 = vsub.f32 %v1042, %v1282
    %v1284 = vand.u32 %v1283, 4294901760
    %v1285 = vsub.f32 %v1283, %v1284
    %v1286 = vand.u32 %v1285, 4294901760
    %1287 = vmatpush1.msra.mxu0 %v1286
    %1288 = vmatprep.subr.mxu0 0.0
    %v1289 = vand.u32 %v1043, 4294901760
    %v1290 = vsub.f32 %v1043, %v1289
    %v1291 = vand.u32 %v1290, 4294901760
    %v1292 = vsub.f32 %v1290, %v1291
    %v1293 = vand.u32 %v1292, 4294901760
    %1294 = vmatpush1.msra.mxu0 %v1293
    %1295 = vmatprep.subr.mxu0 0.0
    %v1296 = vand.u32 %v1044, 4294901760
    %v1297 = vsub.f32 %v1044, %v1296
    %v1298 = vand.u32 %v1297, 4294901760
    %v1299 = vsub.f32 %v1297, %v1298
    %v1300 = vand.u32 %v1299, 4294901760
    %1301 = vmatpush1.msra.mxu0 %v1300
    %1302 = vmatprep.subr.mxu0 0.0
    %v1303 = vand.u32 %v1045, 4294901760
    %v1304 = vsub.f32 %v1045, %v1303
    %v1305 = vand.u32 %v1304, 4294901760
    %v1306 = vsub.f32 %v1304, %v1305
    %v1307 = vand.u32 %v1306, 4294901760
    %1308 = vmatpush1.msra.mxu0 %v1307
    %1309 = vmatprep.subr.mxu0 0.0
    %v1310 = vand.u32 %v1046, 4294901760
    %v1311 = vsub.f32 %v1046, %v1310
    %v1312 = vand.u32 %v1311, 4294901760
    %v1313 = vsub.f32 %v1311, %v1312
    %v1314 = vand.u32 %v1313, 4294901760
    %1315 = vmatpush1.msra.mxu0 %v1314
    %1316 = vmatprep.subr.mxu0 0.0
    %v1317 = vand.u32 %v1047, 4294901760
    %v1318 = vsub.f32 %v1047, %v1317
    %v1319 = vand.u32 %v1318, 4294901760
    %v1320 = vsub.f32 %v1318, %v1319
    %v1321 = vand.u32 %v1320, 4294901760
    %1322 = vmatpush1.msra.mxu0 %v1321
    %1323 = vmatprep.subr.mxu0 0.0
    %v1324 = vand.u32 %v1048, 4294901760
    %v1325 = vsub.f32 %v1048, %v1324
    %v1326 = vand.u32 %v1325, 4294901760
    %v1327 = vsub.f32 %v1325, %v1326
    %v1328 = vand.u32 %v1327, 4294901760
    %1329 = vmatpush1.msra.mxu0 %v1328
    %1330 = vmatprep.subr.mxu0 0.0
    %1331 = vmatpush1.msra.mxu0 0.0
    %1332 = vmatprep.subr.mxu0 0.0
    %1333 = vmatpush1.msra.mxu0 0.0
    %1334 = vmatprep.subr.mxu0 0.0
    %1335 = vmatpush1.msra.mxu0 0.0
    %1336 = vmatprep.subr.mxu0 0.0
    %1337 = vmatpush1.msra.mxu0 0.0
    %1338 = vmatprep.subr.mxu0 0.0
    %1339 = vmatpush1.msra.mxu0 0.0
    %1340 = vmatprep.subr.mxu0 0.0
    %1341 = vmatpush1.msra.mxu0 0.0
    %1342 = vmatprep.subr.mxu0 0.0
    %1343 = vmatpush1.msra.mxu0 0.0
    %1344 = vmatprep.subr.mxu0 0.0
    %1345 = vmatpush1.msra.mxu0 0.0
    %1346 = vmatprep.subr.mxu0 0.0
    %1347 = vmatpush1.msra.mxu0 0.0
    %1348 = vmatprep.subr.mxu0 0.0
    %1349 = vmatpush1.msra.mxu0 0.0
    %1350 = vmatprep.subr.mxu0 0.0
    %1351 = vmatpush1.msra.mxu0 0.0
    %1352 = vmatprep.subr.mxu0 0.0
    %1353 = vmatpush1.msra.mxu0 0.0
    %1354 = vmatprep.subr.mxu0 0.0
    %1355 = vmatpush1.msra.mxu0 0.0
    %1356 = vmatprep.subr.mxu0 0.0
    %1357 = vmatpush1.msra.mxu0 0.0
    %1358 = vmatprep.subr.mxu0 0.0
    %1359 = vmatpush1.msra.mxu0 0.0
    %1360 = vmatprep.subr.mxu0 0.0
    %1361 = vmatpush1.msra.mxu0 0.0
    %1362 = vmatprep.mubr.f32.mxu0 0.0
    %v1363 = vand.u32 %v1024, 4294901760
    %1364 = vmatmul.mubr.f32.gmra.mrb[0].mxu0 %v1363
    %v1365 = vpop.f32.mrb[0].mxu0
    %v1366 = vadd.f32 %v1145, %v1365
    %v1367 = vpop.f32.mrb[0].mxu0
    %1368 = vmatprep.mubr.f32.mxu0 0.0
    %v1369 = vand.u32 %v1025, 4294901760
    %1370 = vmatmul.mubr.f32.gmra.mrb[0].mxu0 %v1369
    %v1371 = vpop.f32.mrb[0].mxu0
    %v1372 = vadd.f32 %v1155, %v1371
    %v1373 = vpop.f32.mrb[0].mxu0
    %1374 = vmatprep.mubr.f32.mxu0 0.0
    %v1375 = vand.u32 %v1026, 4294901760
    %1376 = vmatmul.mubr.f32.gmra.mrb[0].mxu0 %v1375
    %v1377 = vpop.f32.mrb[0].mxu0
    %v1378 = vadd.f32 %v1165, %v1377
    %v1379 = vpop.f32.mrb[0].mxu0
    %1380 = vmatprep.mubr.f32.mxu0 0.0
    %v1381 = vand.u32 %v1027, 4294901760
    %1382 = vmatmul.mubr.f32.gmra.mrb[0].mxu0 %v1381
    %v1383 = vpop.f32.mrb[0].mxu0
    %v1384 = vadd.f32 %v1175, %v1383
    %v1385 = vpop.f32.mrb[0].mxu0
    %1386 = vmatprep.mubr.f32.mxu0 0.0
    %v1387 = vand.u32 %v1028, 4294901760
    %1388 = vmatmul.mubr.f32.gmra.mrb[0].mxu0 %v1387
    %v1389 = vpop.f32.mrb[0].mxu0
    %v1390 = vadd.f32 %v1185, %v1389
    %v1391 = vpop.f32.mrb[0].mxu0
    %1392 = vmatprep.mubr.f32.mxu0 0.0
    %v1393 = vand.u32 %v1029, 4294901760
    %1394 = vmatmul.mubr.f32.gmra.mrb[0].mxu0 %v1393
    %v1395 = vpop.f32.mrb[0].mxu0
    %v1396 = vadd.f32 %v1195, %v1395
    %v1397 = vpop.f32.mrb[0].mxu0
    %1398 = vmatprep.mubr.f32.mxu0 0.0
    %v1399 = vand.u32 %v1030, 4294901760
    %1400 = vmatmul.mubr.f32.gmra.mrb[0].mxu0 %v1399
    %v1401 = vpop.f32.mrb[0].mxu0
    %v1402 = vadd.f32 %v1205, %v1401
    %v1403 = vpop.f32.mrb[0].mxu0
    %1404 = vmatprep.mubr.f32.mxu0 0.0
    %v1405 = vand.u32 %v1031, 4294901760
    %1406 = vmatmul.mubr.f32.gmra.mrb[0].mxu0 %v1405
    %v1407 = vpop.f32.mrb[0].mxu0
    %v1408 = vadd.f32 %v1215, %v1407
    %v1409 = vpop.f32.mrb[0].mxu0
    %1410 = vdwg.mxu0
    %1411 = vmatprep.subr.mxu0 0.0
    %v1412 = vand.u32 %v1033, 4294901760
    %v1413 = vsub.f32 %v1033, %v1412
    %1414 = vmatpush1.msra.mxu0 %v1413
    %1415 = vmatprep.subr.mxu0 0.0
    %v1416 = vand.u32 %v1034, 4294901760
    %v1417 = vsub.f32 %v1034, %v1416
    %1418 = vmatpush1.msra.mxu0 %v1417
    %1419 = vmatprep.subr.mxu0 0.0
    %v1420 = vand.u32 %v1035, 4294901760
    %v1421 = vsub.f32 %v1035, %v1420
    %1422 = vmatpush1.msra.mxu0 %v1421
    %1423 = vmatprep.subr.mxu0 0.0
    %v1424 = vand.u32 %v1036, 4294901760
    %v1425 = vsub.f32 %v1036, %v1424
    %1426 = vmatpush1.msra.mxu0 %v1425
    %1427 = vmatprep.subr.mxu0 0.0
    %v1428 = vand.u32 %v1037, 4294901760
    %v1429 = vsub.f32 %v1037, %v1428
    %1430 = vmatpush1.msra.mxu0 %v1429
    %1431 = vmatprep.subr.mxu0 0.0
    %v1432 = vand.u32 %v1038, 4294901760
    %v1433 = vsub.f32 %v1038, %v1432
    %1434 = vmatpush1.msra.mxu0 %v1433
    %1435 = vmatprep.subr.mxu0 0.0
    %v1436 = vand.u32 %v1039, 4294901760
    %v1437 = vsub.f32 %v1039, %v1436
    %1438 = vmatpush1.msra.mxu0 %v1437
    %1439 = vmatprep.subr.mxu0 0.0
    %v1440 = vand.u32 %v1040, 4294901760
    %v1441 = vsub.f32 %v1040, %v1440
    %1442 = vmatpush1.msra.mxu0 %v1441
    %1443 = vmatprep.subr.mxu0 0.0
    %v1444 = vand.u32 %v1041, 4294901760
    %v1445 = vsub.f32 %v1041, %v1444
    %1446 = vmatpush1.msra.mxu0 %v1445
    %1447 = vmatprep.subr.mxu0 0.0
    %v1448 = vand.u32 %v1042, 4294901760
    %v1449 = vsub.f32 %v1042, %v1448
    %1450 = vmatpush1.msra.mxu0 %v1449
    %1451 = vmatprep.subr.mxu0 0.0
    %v1452 = vand.u32 %v1043, 4294901760
    %v1453 = vsub.f32 %v1043, %v1452
    %1454 = vmatpush1.msra.mxu0 %v1453
    %1455 = vmatprep.subr.mxu0 0.0
    %v1456 = vand.u32 %v1044, 4294901760
    %v1457 = vsub.f32 %v1044, %v1456
    %1458 = vmatpush1.msra.mxu0 %v1457
    %1459 = vmatprep.subr.mxu0 0.0
    %v1460 = vand.u32 %v1045, 4294901760
    %v1461 = vsub.f32 %v1045, %v1460
    %1462 = vmatpush1.msra.mxu0 %v1461
    %1463 = vmatprep.subr.mxu0 0.0
    %v1464 = vand.u32 %v1046, 4294901760
    %v1465 = vsub.f32 %v1046, %v1464
    %1466 = vmatpush1.msra.mxu0 %v1465
    %1467 = vmatprep.subr.mxu0 0.0
    %v1468 = vand.u32 %v1047, 4294901760
    %v1469 = vsub.f32 %v1047, %v1468
    %1470 = vmatpush1.msra.mxu0 %v1469
    %1471 = vmatprep.subr.mxu0 0.0
    %v1472 = vand.u32 %v1048, 4294901760
    %v1473 = vsub.f32 %v1048, %v1472
    %1474 = vmatpush1.msra.mxu0 %v1473
    %1475 = vmatprep.subr.mxu0 0.0
    %1476 = vmatpush1.msra.mxu0 0.0
    %1477 = vmatprep.subr.mxu0 0.0
    %1478 = vmatpush1.msra.mxu0 0.0
    %1479 = vmatprep.subr.mxu0 0.0
    %1480 = vmatpush1.msra.mxu0 0.0
    %1481 = vmatprep.subr.mxu0 0.0
    %1482 = vmatpush1.msra.mxu0 0.0
    %1483 = vmatprep.subr.mxu0 0.0
    %1484 = vmatpush1.msra.mxu0 0.0
    %1485 = vmatprep.subr.mxu0 0.0
    %1486 = vmatpush1.msra.mxu0 0.0
    %1487 = vmatprep.subr.mxu0 0.0
    %1488 = vmatpush1.msra.mxu0 0.0
    %1489 = vmatprep.subr.mxu0 0.0
    %1490 = vmatpush1.msra.mxu0 0.0
    %1491 = vmatprep.subr.mxu0 0.0
    %1492 = vmatpush1.msra.mxu0 0.0
    %1493 = vmatprep.subr.mxu0 0.0
    %1494 = vmatpush1.msra.mxu0 0.0
    %1495 = vmatprep.subr.mxu0 0.0
    %1496 = vmatpush1.msra.mxu0 0.0
    %1497 = vmatprep.subr.mxu0 0.0
    %1498 = vmatpush1.msra.mxu0 0.0
    %1499 = vmatprep.subr.mxu0 0.0
    %1500 = vmatpush1.msra.mxu0 0.0
    %1501 = vmatprep.subr.mxu0 0.0
    %1502 = vmatpush1.msra.mxu0 0.0
    %1503 = vmatprep.subr.mxu0 0.0
    %1504 = vmatpush1.msra.mxu0 0.0
    %1505 = vmatprep.subr.mxu0 0.0
    %1506 = vmatpush1.msra.mxu0 0.0
    %1507 = vmatprep.mubr.f32.mxu0 0.0
    %v1508 = vand.u32 %v1024, 4294901760
    %v1509 = vsub.f32 %v1024, %v1508
    %1510 = vmatmul.mubr.f32.gmra.mrb[0].mxu0 %v1509
    %v1511 = vpop.f32.mrb[0].mxu0
    %v1512 = vadd.f32 %v1366, %v1511
    %v1513 = vpop.f32.mrb[0].mxu0
    %1514 = vmatprep.mubr.f32.mxu0 0.0
    %v1515 = vand.u32 %v1025, 4294901760
    %v1516 = vsub.f32 %v1025, %v1515
    %1517 = vmatmul.mubr.f32.gmra.mrb[0].mxu0 %v1516
    %v1518 = vpop.f32.mrb[0].mxu0
    %v1519 = vadd.f32 %v1372, %v1518
    %v1520 = vpop.f32.mrb[0].mxu0
    %1521 = vmatprep.mubr.f32.mxu0 0.0
    %v1522 = vand.u32 %v1026, 4294901760
    %v1523 = vsub.f32 %v1026, %v1522
    %1524 = vmatmul.mubr.f32.gmra.mrb[0].mxu0 %v1523
    %v1525 = vpop.f32.mrb[0].mxu0
    %v1526 = vadd.f32 %v1378, %v1525
    %v1527 = vpop.f32.mrb[0].mxu0
    %1528 = vmatprep.mubr.f32.mxu0 0.0
    %v1529 = vand.u32 %v1027, 4294901760
    %v1530 = vsub.f32 %v1027, %v1529
    %1531 = vmatmul.mubr.f32.gmra.mrb[0].mxu0 %v1530
    %v1532 = vpop.f32.mrb[0].mxu0
    %v1533 = vadd.f32 %v1384, %v1532
    %v1534 = vpop.f32.mrb[0].mxu0
    %1535 = vmatprep.mubr.f32.mxu0 0.0
    %v1536 = vand.u32 %v1028, 4294901760
    %v1537 = vsub.f32 %v1028, %v1536
    %1538 = vmatmul.mubr.f32.gmra.mrb[0].mxu0 %v1537
    %v1539 = vpop.f32.mrb[0].mxu0
    %v1540 = vadd.f32 %v1390, %v1539
    %v1541 = vpop.f32.mrb[0].mxu0
    %1542 = vmatprep.mubr.f32.mxu0 0.0
    %v1543 = vand.u32 %v1029, 4294901760
    %v1544 = vsub.f32 %v1029, %v1543
    %1545 = vmatmul.mubr.f32.gmra.mrb[0].mxu0 %v1544
    %v1546 = vpop.f32.mrb[0].mxu0
    %v1547 = vadd.f32 %v1396, %v1546
    %v1548 = vpop.f32.mrb[0].mxu0
    %1549 = vmatprep.mubr.f32.mxu0 0.0
    %v1550 = vand.u32 %v1030, 4294901760
    %v1551 = vsub.f32 %v1030, %v1550
    %1552 = vmatmul.mubr.f32.gmra.mrb[0].mxu0 %v1551
    %v1553 = vpop.f32.mrb[0].mxu0
    %v1554 = vadd.f32 %v1402, %v1553
    %v1555 = vpop.f32.mrb[0].mxu0
    %1556 = vmatprep.mubr.f32.mxu0 0.0
    %v1557 = vand.u32 %v1031, 4294901760
    %v1558 = vsub.f32 %v1031, %v1557
    %1559 = vmatmul.mubr.f32.gmra.mrb[0].mxu0 %v1558
    %v1560 = vpop.f32.mrb[0].mxu0
    %v1561 = vadd.f32 %v1408, %v1560
    %v1562 = vpop.f32.mrb[0].mxu0
    %1563 = vdwg.mxu0
    %1564 = vmatprep.subr.mxu0 0.0
    %v1565 = vand.u32 %v1033, 4294901760
    %1566 = vmatpush1.msra.mxu0 %v1565
    %1567 = vmatprep.subr.mxu0 0.0
    %v1568 = vand.u32 %v1034, 4294901760
    %1569 = vmatpush1.msra.mxu0 %v1568
    %1570 = vmatprep.subr.mxu0 0.0
    %v1571 = vand.u32 %v1035, 4294901760
    %1572 = vmatpush1.msra.mxu0 %v1571
    %1573 = vmatprep.subr.mxu0 0.0
    %v1574 = vand.u32 %v1036, 4294901760
    %1575 = vmatpush1.msra.mxu0 %v1574
    %1576 = vmatprep.subr.mxu0 0.0
    %v1577 = vand.u32 %v1037, 4294901760
    %1578 = vmatpush1.msra.mxu0 %v1577
    %1579 = vmatprep.subr.mxu0 0.0
    %v1580 = vand.u32 %v1038, 4294901760
    %1581 = vmatpush1.msra.mxu0 %v1580
    %1582 = vmatprep.subr.mxu0 0.0
    %v1583 = vand.u32 %v1039, 4294901760
    %1584 = vmatpush1.msra.mxu0 %v1583
    %1585 = vmatprep.subr.mxu0 0.0
    %v1586 = vand.u32 %v1040, 4294901760
    %1587 = vmatpush1.msra.mxu0 %v1586
    %1588 = vmatprep.subr.mxu0 0.0
    %v1589 = vand.u32 %v1041, 4294901760
    %1590 = vmatpush1.msra.mxu0 %v1589
    %1591 = vmatprep.subr.mxu0 0.0
    %v1592 = vand.u32 %v1042, 4294901760
    %1593 = vmatpush1.msra.mxu0 %v1592
    %1594 = vmatprep.subr.mxu0 0.0
    %v1595 = vand.u32 %v1043, 4294901760
    %1596 = vmatpush1.msra.mxu0 %v1595
    %1597 = vmatprep.subr.mxu0 0.0
    %v1598 = vand.u32 %v1044, 4294901760
    %1599 = vmatpush1.msra.mxu0 %v1598
    %1600 = vmatprep.subr.mxu0 0.0
    %v1601 = vand.u32 %v1045, 4294901760
    %1602 = vmatpush1.msra.mxu0 %v1601
    %1603 = vmatprep.subr.mxu0 0.0
    %v1604 = vand.u32 %v1046, 4294901760
    %1605 = vmatpush1.msra.mxu0 %v1604
    %1606 = vmatprep.subr.mxu0 0.0
    %v1607 = vand.u32 %v1047, 4294901760
    %1608 = vmatpush1.msra.mxu0 %v1607
    %1609 = vmatprep.subr.mxu0 0.0
    %v1610 = vand.u32 %v1048, 4294901760
    %1611 = vmatpush1.msra.mxu0 %v1610
    %1612 = vmatprep.subr.mxu0 0.0
    %1613 = vmatpush1.msra.mxu0 0.0
    %1614 = vmatprep.subr.mxu0 0.0
    %1615 = vmatpush1.msra.mxu0 0.0
    %1616 = vmatprep.subr.mxu0 0.0
    %1617 = vmatpush1.msra.mxu0 0.0
    %1618 = vmatprep.subr.mxu0 0.0
    %1619 = vmatpush1.msra.mxu0 0.0
    %1620 = vmatprep.subr.mxu0 0.0
    %1621 = vmatpush1.msra.mxu0 0.0
    %1622 = vmatprep.subr.mxu0 0.0
    %1623 = vmatpush1.msra.mxu0 0.0
    %1624 = vmatprep.subr.mxu0 0.0
    %1625 = vmatpush1.msra.mxu0 0.0
    %1626 = vmatprep.subr.mxu0 0.0
    %1627 = vmatpush1.msra.mxu0 0.0
    %1628 = vmatprep.subr.mxu0 0.0
    %1629 = vmatpush1.msra.mxu0 0.0
    %1630 = vmatprep.subr.mxu0 0.0
    %1631 = vmatpush1.msra.mxu0 0.0
    %1632 = vmatprep.subr.mxu0 0.0
    %1633 = vmatpush1.msra.mxu0 0.0
    %1634 = vmatprep.subr.mxu0 0.0
    %1635 = vmatpush1.msra.mxu0 0.0
    %1636 = vmatprep.subr.mxu0 0.0
    %1637 = vmatpush1.msra.mxu0 0.0
    %1638 = vmatprep.subr.mxu0 0.0
    %1639 = vmatpush1.msra.mxu0 0.0
    %1640 = vmatprep.subr.mxu0 0.0
    %1641 = vmatpush1.msra.mxu0 0.0
    %1642 = vmatprep.subr.mxu0 0.0
    %1643 = vmatpush1.msra.mxu0 0.0
    %1644 = vmatprep.mubr.f32.mxu0 0.0
    %v1645 = vand.u32 %v1024, 4294901760
    %v1646 = vsub.f32 %v1024, %v1645
    %v1647 = vand.u32 %v1646, 4294901760
    %1648 = vmatmul.mubr.f32.gmra.mrb[0].mxu0 %v1647
    %v1649 = vpop.f32.mrb[0].mxu0
    %v1650 = vadd.f32 %v1512, %v1649
    %v1651 = vpop.f32.mrb[0].mxu0
    %1652 = vmatprep.mubr.f32.mxu0 0.0
    %v1653 = vand.u32 %v1025, 4294901760
    %v1654 = vsub.f32 %v1025, %v1653
    %v1655 = vand.u32 %v1654, 4294901760
    %1656 = vmatmul.mubr.f32.gmra.mrb[0].mxu0 %v1655
    %v1657 = vpop.f32.mrb[0].mxu0
    %v1658 = vadd.f32 %v1519, %v1657
    %v1659 = vpop.f32.mrb[0].mxu0
    %1660 = vmatprep.mubr.f32.mxu0 0.0
    %v1661 = vand.u32 %v1026, 4294901760
    %v1662 = vsub.f32 %v1026, %v1661
    %v1663 = vand.u32 %v1662, 4294901760
    %1664 = vmatmul.mubr.f32.gmra.mrb[0].mxu0 %v1663
    %v1665 = vpop.f32.mrb[0].mxu0
    %v1666 = vadd.f32 %v1526, %v1665
    %v1667 = vpop.f32.mrb[0].mxu0
    %1668 = vmatprep.mubr.f32.mxu0 0.0
    %v1669 = vand.u32 %v1027, 4294901760
    %v1670 = vsub.f32 %v1027, %v1669
    %v1671 = vand.u32 %v1670, 4294901760
    %1672 = vmatmul.mubr.f32.gmra.mrb[0].mxu0 %v1671
    %v1673 = vpop.f32.mrb[0].mxu0
    %v1674 = vadd.f32 %v1533, %v1673
    %v1675 = vpop.f32.mrb[0].mxu0
    %1676 = vmatprep.mubr.f32.mxu0 0.0
    %v1677 = vand.u32 %v1028, 4294901760
    %v1678 = vsub.f32 %v1028, %v1677
    %v1679 = vand.u32 %v1678, 4294901760
    %1680 = vmatmul.mubr.f32.gmra.mrb[0].mxu0 %v1679
    %v1681 = vpop.f32.mrb[0].mxu0
    %v1682 = vadd.f32 %v1540, %v1681
    %v1683 = vpop.f32.mrb[0].mxu0
    %1684 = vmatprep.mubr.f32.mxu0 0.0
    %v1685 = vand.u32 %v1029, 4294901760
    %v1686 = vsub.f32 %v1029, %v1685
    %v1687 = vand.u32 %v1686, 4294901760
    %1688 = vmatmul.mubr.f32.gmra.mrb[0].mxu0 %v1687
    %v1689 = vpop.f32.mrb[0].mxu0
    %v1690 = vadd.f32 %v1547, %v1689
    %v1691 = vpop.f32.mrb[0].mxu0
    %1692 = vmatprep.mubr.f32.mxu0 0.0
    %v1693 = vand.u32 %v1030, 4294901760
    %v1694 = vsub.f32 %v1030, %v1693
    %v1695 = vand.u32 %v1694, 4294901760
    %1696 = vmatmul.mubr.f32.gmra.mrb[0].mxu0 %v1695
    %v1697 = vpop.f32.mrb[0].mxu0
    %v1698 = vadd.f32 %v1554, %v1697
    %v1699 = vpop.f32.mrb[0].mxu0
    %1700 = vmatprep.mubr.f32.mxu0 0.0
    %v1701 = vand.u32 %v1031, 4294901760
    %v1702 = vsub.f32 %v1031, %v1701
    %v1703 = vand.u32 %v1702, 4294901760
    %1704 = vmatmul.mubr.f32.gmra.mrb[0].mxu0 %v1703
    %v1705 = vpop.f32.mrb[0].mxu0
    %v1706 = vadd.f32 %v1561, %v1705
    %v1707 = vpop.f32.mrb[0].mxu0
    %1708 = vdwg.mxu0
    %1709 = vmatprep.subr.mxu0 0.0
    %v1710 = vand.u32 %v1033, 4294901760
    %v1711 = vsub.f32 %v1033, %v1710
    %v1712 = vand.u32 %v1711, 4294901760
    %1713 = vmatpush1.msra.mxu0 %v1712
    %1714 = vmatprep.subr.mxu0 0.0
    %v1715 = vand.u32 %v1034, 4294901760
    %v1716 = vsub.f32 %v1034, %v1715
    %v1717 = vand.u32 %v1716, 4294901760
    %1718 = vmatpush1.msra.mxu0 %v1717
    %1719 = vmatprep.subr.mxu0 0.0
    %v1720 = vand.u32 %v1035, 4294901760
    %v1721 = vsub.f32 %v1035, %v1720
    %v1722 = vand.u32 %v1721, 4294901760
    %1723 = vmatpush1.msra.mxu0 %v1722
    %1724 = vmatprep.subr.mxu0 0.0
    %v1725 = vand.u32 %v1036, 4294901760
    %v1726 = vsub.f32 %v1036, %v1725
    %v1727 = vand.u32 %v1726, 4294901760
    %1728 = vmatpush1.msra.mxu0 %v1727
    %1729 = vmatprep.subr.mxu0 0.0
    %v1730 = vand.u32 %v1037, 4294901760
    %v1731 = vsub.f32 %v1037, %v1730
    %v1732 = vand.u32 %v1731, 4294901760
    %1733 = vmatpush1.msra.mxu0 %v1732
    %1734 = vmatprep.subr.mxu0 0.0
    %v1735 = vand.u32 %v1038, 4294901760
    %v1736 = vsub.f32 %v1038, %v1735
    %v1737 = vand.u32 %v1736, 4294901760
    %1738 = vmatpush1.msra.mxu0 %v1737
    %1739 = vmatprep.subr.mxu0 0.0
    %v1740 = vand.u32 %v1039, 4294901760
    %v1741 = vsub.f32 %v1039, %v1740
    %v1742 = vand.u32 %v1741, 4294901760
    %1743 = vmatpush1.msra.mxu0 %v1742
    %1744 = vmatprep.subr.mxu0 0.0
    %v1745 = vand.u32 %v1040, 4294901760
    %v1746 = vsub.f32 %v1040, %v1745
    %v1747 = vand.u32 %v1746, 4294901760
    %1748 = vmatpush1.msra.mxu0 %v1747
    %1749 = vmatprep.subr.mxu0 0.0
    %v1750 = vand.u32 %v1041, 4294901760
    %v1751 = vsub.f32 %v1041, %v1750
    %v1752 = vand.u32 %v1751, 4294901760
    %1753 = vmatpush1.msra.mxu0 %v1752
    %1754 = vmatprep.subr.mxu0 0.0
    %v1755 = vand.u32 %v1042, 4294901760
    %v1756 = vsub.f32 %v1042, %v1755
    %v1757 = vand.u32 %v1756, 4294901760
    %1758 = vmatpush1.msra.mxu0 %v1757
    %1759 = vmatprep.subr.mxu0 0.0
    %v1760 = vand.u32 %v1043, 4294901760
    %v1761 = vsub.f32 %v1043, %v1760
    %v1762 = vand.u32 %v1761, 4294901760
    %1763 = vmatpush1.msra.mxu0 %v1762
    %1764 = vmatprep.subr.mxu0 0.0
    %v1765 = vand.u32 %v1044, 4294901760
    %v1766 = vsub.f32 %v1044, %v1765
    %v1767 = vand.u32 %v1766, 4294901760
    %1768 = vmatpush1.msra.mxu0 %v1767
    %1769 = vmatprep.subr.mxu0 0.0
    %v1770 = vand.u32 %v1045, 4294901760
    %v1771 = vsub.f32 %v1045, %v1770
    %v1772 = vand.u32 %v1771, 4294901760
    %1773 = vmatpush1.msra.mxu0 %v1772
    %1774 = vmatprep.subr.mxu0 0.0
    %v1775 = vand.u32 %v1046, 4294901760
    %v1776 = vsub.f32 %v1046, %v1775
    %v1777 = vand.u32 %v1776, 4294901760
    %1778 = vmatpush1.msra.mxu0 %v1777
    %1779 = vmatprep.subr.mxu0 0.0
    %v1780 = vand.u32 %v1047, 4294901760
    %v1781 = vsub.f32 %v1047, %v1780
    %v1782 = vand.u32 %v1781, 4294901760
    %1783 = vmatpush1.msra.mxu0 %v1782
    %1784 = vmatprep.subr.mxu0 0.0
    %v1785 = vand.u32 %v1048, 4294901760
    %v1786 = vsub.f32 %v1048, %v1785
    %v1787 = vand.u32 %v1786, 4294901760
    %1788 = vmatpush1.msra.mxu0 %v1787
    %1789 = vmatprep.subr.mxu0 0.0
    %1790 = vmatpush1.msra.mxu0 0.0
    %1791 = vmatprep.subr.mxu0 0.0
    %1792 = vmatpush1.msra.mxu0 0.0
    %1793 = vmatprep.subr.mxu0 0.0
    %1794 = vmatpush1.msra.mxu0 0.0
    %1795 = vmatprep.subr.mxu0 0.0
    %1796 = vmatpush1.msra.mxu0 0.0
    %1797 = vmatprep.subr.mxu0 0.0
    %1798 = vmatpush1.msra.mxu0 0.0
    %1799 = vmatprep.subr.mxu0 0.0
    %1800 = vmatpush1.msra.mxu0 0.0
    %1801 = vmatprep.subr.mxu0 0.0
    %1802 = vmatpush1.msra.mxu0 0.0
    %1803 = vmatprep.subr.mxu0 0.0
    %1804 = vmatpush1.msra.mxu0 0.0
    %1805 = vmatprep.subr.mxu0 0.0
    %1806 = vmatpush1.msra.mxu0 0.0
    %1807 = vmatprep.subr.mxu0 0.0
    %1808 = vmatpush1.msra.mxu0 0.0
    %1809 = vmatprep.subr.mxu0 0.0
    %1810 = vmatpush1.msra.mxu0 0.0
    %1811 = vmatprep.subr.mxu0 0.0
    %1812 = vmatpush1.msra.mxu0 0.0
    %1813 = vmatprep.subr.mxu0 0.0
    %1814 = vmatpush1.msra.mxu0 0.0
    %1815 = vmatprep.subr.mxu0 0.0
    %1816 = vmatpush1.msra.mxu0 0.0
    %1817 = vmatprep.subr.mxu0 0.0
    %1818 = vmatpush1.msra.mxu0 0.0
    %1819 = vmatprep.subr.mxu0 0.0
    %1820 = vmatpush1.msra.mxu0 0.0
    %1821 = vmatprep.mubr.f32.mxu0 0.0
    %v1822 = vand.u32 %v1024, 4294901760
    %1823 = vmatmul.mubr.f32.gmra.mrb[0].mxu0 %v1822
    %v1824 = vpop.f32.mrb[0].mxu0
    %v1825 = vadd.f32 %v1650, %v1824
    %v1826 = vpop.f32.mrb[0].mxu0
    %1827 = vmatprep.mubr.f32.mxu0 0.0
    %v1828 = vand.u32 %v1025, 4294901760
    %1829 = vmatmul.mubr.f32.gmra.mrb[0].mxu0 %v1828
    %v1830 = vpop.f32.mrb[0].mxu0
    %v1831 = vadd.f32 %v1658, %v1830
    %v1832 = vpop.f32.mrb[0].mxu0
    %1833 = vmatprep.mubr.f32.mxu0 0.0
    %v1834 = vand.u32 %v1026, 4294901760
    %1835 = vmatmul.mubr.f32.gmra.mrb[0].mxu0 %v1834
    %v1836 = vpop.f32.mrb[0].mxu0
    %v1837 = vadd.f32 %v1666, %v1836
    %v1838 = vpop.f32.mrb[0].mxu0
    %1839 = vmatprep.mubr.f32.mxu0 0.0
    %v1840 = vand.u32 %v1027, 4294901760
    %1841 = vmatmul.mubr.f32.gmra.mrb[0].mxu0 %v1840
    %v1842 = vpop.f32.mrb[0].mxu0
    %v1843 = vadd.f32 %v1674, %v1842
    %v1844 = vpop.f32.mrb[0].mxu0
    %1845 = vmatprep.mubr.f32.mxu0 0.0
    %v1846 = vand.u32 %v1028, 4294901760
    %1847 = vmatmul.mubr.f32.gmra.mrb[0].mxu0 %v1846
    %v1848 = vpop.f32.mrb[0].mxu0
    %v1849 = vadd.f32 %v1682, %v1848
    %v1850 = vpop.f32.mrb[0].mxu0
    %1851 = vmatprep.mubr.f32.mxu0 0.0
    %v1852 = vand.u32 %v1029, 4294901760
    %1853 = vmatmul.mubr.f32.gmra.mrb[0].mxu0 %v1852
    %v1854 = vpop.f32.mrb[0].mxu0
    %v1855 = vadd.f32 %v1690, %v1854
    %v1856 = vpop.f32.mrb[0].mxu0
    %1857 = vmatprep.mubr.f32.mxu0 0.0
    %v1858 = vand.u32 %v1030, 4294901760
    %1859 = vmatmul.mubr.f32.gmra.mrb[0].mxu0 %v1858
    %v1860 = vpop.f32.mrb[0].mxu0
    %v1861 = vadd.f32 %v1698, %v1860
    %v1862 = vpop.f32.mrb[0].mxu0
    %1863 = vmatprep.mubr.f32.mxu0 0.0
    %v1864 = vand.u32 %v1031, 4294901760
    %1865 = vmatmul.mubr.f32.gmra.mrb[0].mxu0 %v1864
    %v1866 = vpop.f32.mrb[0].mxu0
    %v1867 = vadd.f32 %v1706, %v1866
    %v1868 = vpop.f32.mrb[0].mxu0
    %1869 = vdwg.mxu0
    %1870 = vmatprep.subr.mxu0 0.0
    %v1871 = vand.u32 %v1033, 4294901760
    %1872 = vmatpush1.msra.mxu0 %v1871
    %1873 = vmatprep.subr.mxu0 0.0
    %v1874 = vand.u32 %v1034, 4294901760
    %1875 = vmatpush1.msra.mxu0 %v1874
    %1876 = vmatprep.subr.mxu0 0.0
    %v1877 = vand.u32 %v1035, 4294901760
    %1878 = vmatpush1.msra.mxu0 %v1877
    %1879 = vmatprep.subr.mxu0 0.0
    %v1880 = vand.u32 %v1036, 4294901760
    %1881 = vmatpush1.msra.mxu0 %v1880
    %1882 = vmatprep.subr.mxu0 0.0
    %v1883 = vand.u32 %v1037, 4294901760
    %1884 = vmatpush1.msra.mxu0 %v1883
    %1885 = vmatprep.subr.mxu0 0.0
    %v1886 = vand.u32 %v1038, 4294901760
    %1887 = vmatpush1.msra.mxu0 %v1886
    %1888 = vmatprep.subr.mxu0 0.0
    %v1889 = vand.u32 %v1039, 4294901760
    %1890 = vmatpush1.msra.mxu0 %v1889
    %1891 = vmatprep.subr.mxu0 0.0
    %v1892 = vand.u32 %v1040, 4294901760
    %1893 = vmatpush1.msra.mxu0 %v1892
    %1894 = vmatprep.subr.mxu0 0.0
    %v1895 = vand.u32 %v1041, 4294901760
    %1896 = vmatpush1.msra.mxu0 %v1895
    %1897 = vmatprep.subr.mxu0 0.0
    %v1898 = vand.u32 %v1042, 4294901760
    %1899 = vmatpush1.msra.mxu0 %v1898
    %1900 = vmatprep.subr.mxu0 0.0
    %v1901 = vand.u32 %v1043, 4294901760
    %1902 = vmatpush1.msra.mxu0 %v1901
    %1903 = vmatprep.subr.mxu0 0.0
    %v1904 = vand.u32 %v1044, 4294901760
    %1905 = vmatpush1.msra.mxu0 %v1904
    %1906 = vmatprep.subr.mxu0 0.0
    %v1907 = vand.u32 %v1045, 4294901760
    %1908 = vmatpush1.msra.mxu0 %v1907
    %1909 = vmatprep.subr.mxu0 0.0
    %v1910 = vand.u32 %v1046, 4294901760
    %1911 = vmatpush1.msra.mxu0 %v1910
    %1912 = vmatprep.subr.mxu0 0.0
    %v1913 = vand.u32 %v1047, 4294901760
    %1914 = vmatpush1.msra.mxu0 %v1913
    %1915 = vmatprep.subr.mxu0 0.0
    %v1916 = vand.u32 %v1048, 4294901760
    %1917 = vmatpush1.msra.mxu0 %v1916
    %1918 = vmatprep.subr.mxu0 0.0
    %1919 = vmatpush1.msra.mxu0 0.0
    %1920 = vmatprep.subr.mxu0 0.0
    %1921 = vmatpush1.msra.mxu0 0.0
    %1922 = vmatprep.subr.mxu0 0.0
    %1923 = vmatpush1.msra.mxu0 0.0
    %1924 = vmatprep.subr.mxu0 0.0
    %1925 = vmatpush1.msra.mxu0 0.0
    %1926 = vmatprep.subr.mxu0 0.0
    %1927 = vmatpush1.msra.mxu0 0.0
    %1928 = vmatprep.subr.mxu0 0.0
    %1929 = vmatpush1.msra.mxu0 0.0
    %1930 = vmatprep.subr.mxu0 0.0
    %1931 = vmatpush1.msra.mxu0 0.0
    %1932 = vmatprep.subr.mxu0 0.0
    %1933 = vmatpush1.msra.mxu0 0.0
    %1934 = vmatprep.subr.mxu0 0.0
    %1935 = vmatpush1.msra.mxu0 0.0
    %1936 = vmatprep.subr.mxu0 0.0
    %1937 = vmatpush1.msra.mxu0 0.0
    %1938 = vmatprep.subr.mxu0 0.0
    %1939 = vmatpush1.msra.mxu0 0.0
    %1940 = vmatprep.subr.mxu0 0.0
    %1941 = vmatpush1.msra.mxu0 0.0
    %1942 = vmatprep.subr.mxu0 0.0
    %1943 = vmatpush1.msra.mxu0 0.0
    %1944 = vmatprep.subr.mxu0 0.0
    %1945 = vmatpush1.msra.mxu0 0.0
    %1946 = vmatprep.subr.mxu0 0.0
    %1947 = vmatpush1.msra.mxu0 0.0
    %1948 = vmatprep.subr.mxu0 0.0
    %1949 = vmatpush1.msra.mxu0 0.0
    %1950 = vmatprep.mubr.f32.mxu0 0.0
    %v1951 = vand.u32 %v1024, 4294901760
    %1952 = vmatmul.mubr.f32.gmra.mrb[0].mxu0 %v1951
    %v1953 = vpop.f32.mrb[0].mxu0
    %v1954 = vadd.f32 %v1825, %v1953
    %v1955 = vpop.f32.mrb[0].mxu0
    %1956 = vmatprep.mubr.f32.mxu0 0.0
    %v1957 = vand.u32 %v1025, 4294901760
    %1958 = vmatmul.mubr.f32.gmra.mrb[0].mxu0 %v1957
    %v1959 = vpop.f32.mrb[0].mxu0
    %v1960 = vadd.f32 %v1831, %v1959
    %v1961 = vpop.f32.mrb[0].mxu0
    %1962 = vmatprep.mubr.f32.mxu0 0.0
    %v1963 = vand.u32 %v1026, 4294901760
    %1964 = vmatmul.mubr.f32.gmra.mrb[0].mxu0 %v1963
    %v1965 = vpop.f32.mrb[0].mxu0
    %v1966 = vadd.f32 %v1837, %v1965
    %v1967 = vpop.f32.mrb[0].mxu0
    %1968 = vmatprep.mubr.f32.mxu0 0.0
    %v1969 = vand.u32 %v1027, 4294901760
    %1970 = vmatmul.mubr.f32.gmra.mrb[0].mxu0 %v1969
    %v1971 = vpop.f32.mrb[0].mxu0
    %v1972 = vadd.f32 %v1843, %v1971
    %v1973 = vpop.f32.mrb[0].mxu0
    %1974 = vmatprep.mubr.f32.mxu0 0.0
    %v1975 = vand.u32 %v1028, 4294901760
    %1976 = vmatmul.mubr.f32.gmra.mrb[0].mxu0 %v1975
    %v1977 = vpop.f32.mrb[0].mxu0
    %v1978 = vadd.f32 %v1849, %v1977
    %v1979 = vpop.f32.mrb[0].mxu0
    %1980 = vmatprep.mubr.f32.mxu0 0.0
    %v1981 = vand.u32 %v1029, 4294901760
    %1982 = vmatmul.mubr.f32.gmra.mrb[0].mxu0 %v1981
    %v1983 = vpop.f32.mrb[0].mxu0
    %v1984 = vadd.f32 %v1855, %v1983
    %v1985 = vpop.f32.mrb[0].mxu0
    %1986 = vmatprep.mubr.f32.mxu0 0.0
    %v1987 = vand.u32 %v1030, 4294901760
    %1988 = vmatmul.mubr.f32.gmra.mrb[0].mxu0 %v1987
    %v1989 = vpop.f32.mrb[0].mxu0
    %v1990 = vadd.f32 %v1861, %v1989
    %v1991 = vpop.f32.mrb[0].mxu0
    %1992 = vmatprep.mubr.f32.mxu0 0.0
    %v1993 = vand.u32 %v1031, 4294901760
    %1994 = vmatmul.mubr.f32.gmra.mrb[0].mxu0 %v1993
    %v1995 = vpop.f32.mrb[0].mxu0
    %v1996 = vadd.f32 %v1867, %v1995
    %v1997 = vpop.f32.mrb[0].mxu0
    %1998 = vdwg.mxu0
    %v1999 = vmul.f32 %v43, %v1954
    %v2000 = vmul.f32 %v44, %v1960
    %v2001 = vmul.f32 %v45, %v1966
    %v2002 = vmul.f32 %v46, %v1972
    %v2003 = vmul.f32 %v47, %v1978
    %v2004 = vmul.f32 %v48, %v1984
    %v2005 = vmul.f32 %v49, %v1990
    %v2006 = vmul.f32 %v50, %v1996
    %v2007 = vadd.f32 %v1999, %v1024
    %v2008 = vadd.f32 %v2000, %v1025
    %v2009 = vadd.f32 %v2001, %v1026
    %v2010 = vadd.f32 %v2002, %v1027
    %v2011 = vadd.f32 %v2003, %v1028
    %v2012 = vadd.f32 %v2004, %v1029
    %v2013 = vadd.f32 %v2005, %v1030
    %v2014 = vadd.f32 %v2006, %v1031
    %s2015 = scalar_lea.vmem [#allocation5], 256
    %v2016 = vld [vmem:[%s2015] sm:$0xff]
    %v2017 = vld [vmem:[%s2015 + $0x8] sm:$0xff]
    %v2018 = vld [vmem:[%s2015 + $0x10] sm:$0xff]
    %v2019 = vld [vmem:[%s2015 + $0x18] sm:$0xff]
    %v2020 = vld [vmem:[%s2015 + $0x20] sm:$0xff]
    %v2021 = vld [vmem:[%s2015 + $0x28] sm:$0xff]
    %v2022 = vld [vmem:[%s2015 + $0x30] sm:$0xff]
    %v2023 = vld [vmem:[%s2015 + $0x38] sm:$0xff]
    %v2024 = vld [vmem:[%s2015 + $0x40] sm:$0xff]
    %v2025 = vld [vmem:[%s2015 + $0x48] sm:$0xff]
    %v2026 = vld [vmem:[%s2015 + $0x50] sm:$0xff]
    %v2027 = vld [vmem:[%s2015 + $0x58] sm:$0xff]
    %v2028 = vld [vmem:[%s2015 + $0x60] sm:$0xff]
    %v2029 = vld [vmem:[%s2015 + $0x68] sm:$0xff]
    %v2030 = vld [vmem:[%s2015 + $0x70] sm:$0xff]
    %v2031 = vld [vmem:[%s2015 + $0x78] sm:$0xff]
    %s2032 = scalar_lea.vmem %s2, 2
    %v2033 = vld [vmem:[%s2032] sm:$0x1]
    %v2035 = vlaneseq
    %v2036 = vshrl.u32 %v2035, 7
    %v2037 = vsub.s32 0, %v2036
    %v2038 = vrot.slane %v2033, %v2037
    %2040 = vmatprep.subr.mxu0 0.0
    %v2041 = vand.u32 %v2016, 4294901760
    %2042 = vmatpush1.msra.mxu0 %v2041
    %2043 = vmatprep.subr.mxu0 0.0
    %v2044 = vand.u32 %v2017, 4294901760
    %2045 = vmatpush1.msra.mxu0 %v2044
    %2046 = vmatprep.subr.mxu0 0.0
    %v2047 = vand.u32 %v2018, 4294901760
    %2048 = vmatpush1.msra.mxu0 %v2047
    %2049 = vmatprep.subr.mxu0 0.0
    %v2050 = vand.u32 %v2019, 4294901760
    %2051 = vmatpush1.msra.mxu0 %v2050
    %2052 = vmatprep.subr.mxu0 0.0
    %v2053 = vand.u32 %v2020, 4294901760
    %2054 = vmatpush1.msra.mxu0 %v2053
    %2055 = vmatprep.subr.mxu0 0.0
    %v2056 = vand.u32 %v2021, 4294901760
    %2057 = vmatpush1.msra.mxu0 %v2056
    %2058 = vmatprep.subr.mxu0 0.0
    %v2059 = vand.u32 %v2022, 4294901760
    %2060 = vmatpush1.msra.mxu0 %v2059
    %2061 = vmatprep.subr.mxu0 0.0
    %v2062 = vand.u32 %v2023, 4294901760
    %2063 = vmatpush1.msra.mxu0 %v2062
    %2064 = vmatprep.subr.mxu0 0.0
    %v2065 = vand.u32 %v2024, 4294901760
    %2066 = vmatpush1.msra.mxu0 %v2065
    %2067 = vmatprep.subr.mxu0 0.0
    %v2068 = vand.u32 %v2025, 4294901760
    %2069 = vmatpush1.msra.mxu0 %v2068
    %2070 = vmatprep.subr.mxu0 0.0
    %v2071 = vand.u32 %v2026, 4294901760
    %2072 = vmatpush1.msra.mxu0 %v2071
    %2073 = vmatprep.subr.mxu0 0.0
    %v2074 = vand.u32 %v2027, 4294901760
    %2075 = vmatpush1.msra.mxu0 %v2074
    %2076 = vmatprep.subr.mxu0 0.0
    %v2077 = vand.u32 %v2028, 4294901760
    %2078 = vmatpush1.msra.mxu0 %v2077
    %2079 = vmatprep.subr.mxu0 0.0
    %v2080 = vand.u32 %v2029, 4294901760
    %2081 = vmatpush1.msra.mxu0 %v2080
    %2082 = vmatprep.subr.mxu0 0.0
    %v2083 = vand.u32 %v2030, 4294901760
    %2084 = vmatpush1.msra.mxu0 %v2083
    %2085 = vmatprep.subr.mxu0 0.0
    %v2086 = vand.u32 %v2031, 4294901760
    %2087 = vmatpush1.msra.mxu0 %v2086
    %2088 = vmatprep.subr.mxu0 0.0
    %2089 = vmatpush1.msra.mxu0 0.0
    %2090 = vmatprep.subr.mxu0 0.0
    %2091 = vmatpush1.msra.mxu0 0.0
    %2092 = vmatprep.subr.mxu0 0.0
    %2093 = vmatpush1.msra.mxu0 0.0
    %2094 = vmatprep.subr.mxu0 0.0
    %2095 = vmatpush1.msra.mxu0 0.0
    %2096 = vmatprep.subr.mxu0 0.0
    %2097 = vmatpush1.msra.mxu0 0.0
    %2098 = vmatprep.subr.mxu0 0.0
    %2099 = vmatpush1.msra.mxu0 0.0
    %2100 = vmatprep.subr.mxu0 0.0
    %2101 = vmatpush1.msra.mxu0 0.0
    %2102 = vmatprep.subr.mxu0 0.0
    %2103 = vmatpush1.msra.mxu0 0.0
    %2104 = vmatprep.subr.mxu0 0.0
    %2105 = vmatpush1.msra.mxu0 0.0
    %2106 = vmatprep.subr.mxu0 0.0
    %2107 = vmatpush1.msra.mxu0 0.0
    %2108 = vmatprep.subr.mxu0 0.0
    %2109 = vmatpush1.msra.mxu0 0.0
    %2110 = vmatprep.subr.mxu0 0.0
    %2111 = vmatpush1.msra.mxu0 0.0
    %2112 = vmatprep.subr.mxu0 0.0
    %2113 = vmatpush1.msra.mxu0 0.0
    %2114 = vmatprep.subr.mxu0 0.0
    %2115 = vmatpush1.msra.mxu0 0.0
    %2116 = vmatprep.subr.mxu0 0.0
    %2117 = vmatpush1.msra.mxu0 0.0
    %2118 = vmatprep.subr.mxu0 0.0
    %2119 = vmatpush1.msra.mxu0 0.0
    %2120 = vmatprep.mubr.f32.mxu0 0.0
    %v2121 = vand.u32 %v2007, 4294901760
    %v2122 = vsub.f32 %v2007, %v2121
    %v2123 = vand.u32 %v2122, 4294901760
    %v2124 = vsub.f32 %v2122, %v2123
    %v2125 = vand.u32 %v2124, 4294901760
    %2126 = vmatmul.mubr.f32.gmra.mrb[0].mxu0 %v2125
    %v2127 = vpop.f32.mrb[0].mxu0
    %v2128 = vadd.f32 %v2038, %v2127
    %v2129 = vpop.f32.mrb[0].mxu0
    %2130 = vmatprep.mubr.f32.mxu0 0.0
    %v2131 = vand.u32 %v2008, 4294901760
    %v2132 = vsub.f32 %v2008, %v2131
    %v2133 = vand.u32 %v2132, 4294901760
    %v2134 = vsub.f32 %v2132, %v2133
    %v2135 = vand.u32 %v2134, 4294901760
    %2136 = vmatmul.mubr.f32.gmra.mrb[0].mxu0 %v2135
    %v2137 = vpop.f32.mrb[0].mxu0
    %v2138 = vadd.f32 %v2038, %v2137
    %v2139 = vpop.f32.mrb[0].mxu0
    %2140 = vmatprep.mubr.f32.mxu0 0.0
    %v2141 = vand.u32 %v2009, 4294901760
    %v2142 = vsub.f32 %v2009, %v2141
    %v2143 = vand.u32 %v2142, 4294901760
    %v2144 = vsub.f32 %v2142, %v2143
    %v2145 = vand.u32 %v2144, 4294901760
    %2146 = vmatmul.mubr.f32.gmra.mrb[0].mxu0 %v2145
    %v2147 = vpop.f32.mrb[0].mxu0
    %v2148 = vadd.f32 %v2038, %v2147
    %v2149 = vpop.f32.mrb[0].mxu0
    %2150 = vmatprep.mubr.f32.mxu0 0.0
    %v2151 = vand.u32 %v2010, 4294901760
    %v2152 = vsub.f32 %v2010, %v2151
    %v2153 = vand.u32 %v2152, 4294901760
    %v2154 = vsub.f32 %v2152, %v2153
    %v2155 = vand.u32 %v2154, 4294901760
    %2156 = vmatmul.mubr.f32.gmra.mrb[0].mxu0 %v2155
    %v2157 = vpop.f32.mrb[0].mxu0
    %v2158 = vadd.f32 %v2038, %v2157
    %v2159 = vpop.f32.mrb[0].mxu0
    %2160 = vmatprep.mubr.f32.mxu0 0.0
    %v2161 = vand.u32 %v2011, 4294901760
    %v2162 = vsub.f32 %v2011, %v2161
    %v2163 = vand.u32 %v2162, 4294901760
    %v2164 = vsub.f32 %v2162, %v2163
    %v2165 = vand.u32 %v2164, 4294901760
    %2166 = vmatmul.mubr.f32.gmra.mrb[0].mxu0 %v2165
    %v2167 = vpop.f32.mrb[0].mxu0
    %v2168 = vadd.f32 %v2038, %v2167
    %v2169 = vpop.f32.mrb[0].mxu0
    %2170 = vmatprep.mubr.f32.mxu0 0.0
    %v2171 = vand.u32 %v2012, 4294901760
    %v2172 = vsub.f32 %v2012, %v2171
    %v2173 = vand.u32 %v2172, 4294901760
    %v2174 = vsub.f32 %v2172, %v2173
    %v2175 = vand.u32 %v2174, 4294901760
    %2176 = vmatmul.mubr.f32.gmra.mrb[0].mxu0 %v2175
    %v2177 = vpop.f32.mrb[0].mxu0
    %v2178 = vadd.f32 %v2038, %v2177
    %v2179 = vpop.f32.mrb[0].mxu0
    %2180 = vmatprep.mubr.f32.mxu0 0.0
    %v2181 = vand.u32 %v2013, 4294901760
    %v2182 = vsub.f32 %v2013, %v2181
    %v2183 = vand.u32 %v2182, 4294901760
    %v2184 = vsub.f32 %v2182, %v2183
    %v2185 = vand.u32 %v2184, 4294901760
    %2186 = vmatmul.mubr.f32.gmra.mrb[0].mxu0 %v2185
    %v2187 = vpop.f32.mrb[0].mxu0
    %v2188 = vadd.f32 %v2038, %v2187
    %v2189 = vpop.f32.mrb[0].mxu0
    %2190 = vmatprep.mubr.f32.mxu0 0.0
    %v2191 = vand.u32 %v2014, 4294901760
    %v2192 = vsub.f32 %v2014, %v2191
    %v2193 = vand.u32 %v2192, 4294901760
    %v2194 = vsub.f32 %v2192, %v2193
    %v2195 = vand.u32 %v2194, 4294901760
    %2196 = vmatmul.mubr.f32.gmra.mrb[0].mxu0 %v2195
    %v2197 = vpop.f32.mrb[0].mxu0
    %v2198 = vadd.f32 %v2038, %v2197
    %v2199 = vpop.f32.mrb[0].mxu0
    %2200 = vdwg.mxu0
    %2201 = vmatprep.subr.mxu0 0.0
    %v2202 = vand.u32 %v2016, 4294901760
    %v2203 = vsub.f32 %v2016, %v2202
    %v2204 = vand.u32 %v2203, 4294901760
    %v2205 = vsub.f32 %v2203, %v2204
    %v2206 = vand.u32 %v2205, 4294901760
    %2207 = vmatpush1.msra.mxu0 %v2206
    %2208 = vmatprep.subr.mxu0 0.0
    %v2209 = vand.u32 %v2017, 4294901760
    %v2210 = vsub.f32 %v2017, %v2209
    %v2211 = vand.u32 %v2210, 4294901760
    %v2212 = vsub.f32 %v2210, %v2211
    %v2213 = vand.u32 %v2212, 4294901760
    %2214 = vmatpush1.msra.mxu0 %v2213
    %2215 = vmatprep.subr.mxu0 0.0
    %v2216 = vand.u32 %v2018, 4294901760
    %v2217 = vsub.f32 %v2018, %v2216
    %v2218 = vand.u32 %v2217, 4294901760
    %v2219 = vsub.f32 %v2217, %v2218
    %v2220 = vand.u32 %v2219, 4294901760
    %2221 = vmatpush1.msra.mxu0 %v2220
    %2222 = vmatprep.subr.mxu0 0.0
    %v2223 = vand.u32 %v2019, 4294901760
    %v2224 = vsub.f32 %v2019, %v2223
    %v2225 = vand.u32 %v2224, 4294901760
    %v2226 = vsub.f32 %v2224, %v2225
    %v2227 = vand.u32 %v2226, 4294901760
    %2228 = vmatpush1.msra.mxu0 %v2227
    %2229 = vmatprep.subr.mxu0 0.0
    %v2230 = vand.u32 %v2020, 4294901760
    %v2231 = vsub.f32 %v2020, %v2230
    %v2232 = vand.u32 %v2231, 4294901760
    %v2233 = vsub.f32 %v2231, %v2232
    %v2234 = vand.u32 %v2233, 4294901760
    %2235 = vmatpush1.msra.mxu0 %v2234
    %2236 = vmatprep.subr.mxu0 0.0
    %v2237 = vand.u32 %v2021, 4294901760
    %v2238 = vsub.f32 %v2021, %v2237
    %v2239 = vand.u32 %v2238, 4294901760
    %v2240 = vsub.f32 %v2238, %v2239
    %v2241 = vand.u32 %v2240, 4294901760
    %2242 = vmatpush1.msra.mxu0 %v2241
    %2243 = vmatprep.subr.mxu0 0.0
    %v2244 = vand.u32 %v2022, 4294901760
    %v2245 = vsub.f32 %v2022, %v2244
    %v2246 = vand.u32 %v2245, 4294901760
    %v2247 = vsub.f32 %v2245, %v2246
    %v2248 = vand.u32 %v2247, 4294901760
    %2249 = vmatpush1.msra.mxu0 %v2248
    %2250 = vmatprep.subr.mxu0 0.0
    %v2251 = vand.u32 %v2023, 4294901760
    %v2252 = vsub.f32 %v2023, %v2251
    %v2253 = vand.u32 %v2252, 4294901760
    %v2254 = vsub.f32 %v2252, %v2253
    %v2255 = vand.u32 %v2254, 4294901760
    %2256 = vmatpush1.msra.mxu0 %v2255
    %2257 = vmatprep.subr.mxu0 0.0
    %v2258 = vand.u32 %v2024, 4294901760
    %v2259 = vsub.f32 %v2024, %v2258
    %v2260 = vand.u32 %v2259, 4294901760
    %v2261 = vsub.f32 %v2259, %v2260
    %v2262 = vand.u32 %v2261, 4294901760
    %2263 = vmatpush1.msra.mxu0 %v2262
    %2264 = vmatprep.subr.mxu0 0.0
    %v2265 = vand.u32 %v2025, 4294901760
    %v2266 = vsub.f32 %v2025, %v2265
    %v2267 = vand.u32 %v2266, 4294901760
    %v2268 = vsub.f32 %v2266, %v2267
    %v2269 = vand.u32 %v2268, 4294901760
    %2270 = vmatpush1.msra.mxu0 %v2269
    %2271 = vmatprep.subr.mxu0 0.0
    %v2272 = vand.u32 %v2026, 4294901760
    %v2273 = vsub.f32 %v2026, %v2272
    %v2274 = vand.u32 %v2273, 4294901760
    %v2275 = vsub.f32 %v2273, %v2274
    %v2276 = vand.u32 %v2275, 4294901760
    %2277 = vmatpush1.msra.mxu0 %v2276
    %2278 = vmatprep.subr.mxu0 0.0
    %v2279 = vand.u32 %v2027, 4294901760
    %v2280 = vsub.f32 %v2027, %v2279
    %v2281 = vand.u32 %v2280, 4294901760
    %v2282 = vsub.f32 %v2280, %v2281
    %v2283 = vand.u32 %v2282, 4294901760
    %2284 = vmatpush1.msra.mxu0 %v2283
    %2285 = vmatprep.subr.mxu0 0.0
    %v2286 = vand.u32 %v2028, 4294901760
    %v2287 = vsub.f32 %v2028, %v2286
    %v2288 = vand.u32 %v2287, 4294901760
    %v2289 = vsub.f32 %v2287, %v2288
    %v2290 = vand.u32 %v2289, 4294901760
    %2291 = vmatpush1.msra.mxu0 %v2290
    %2292 = vmatprep.subr.mxu0 0.0
    %v2293 = vand.u32 %v2029, 4294901760
    %v2294 = vsub.f32 %v2029, %v2293
    %v2295 = vand.u32 %v2294, 4294901760
    %v2296 = vsub.f32 %v2294, %v2295
    %v2297 = vand.u32 %v2296, 4294901760
    %2298 = vmatpush1.msra.mxu0 %v2297
    %2299 = vmatprep.subr.mxu0 0.0
    %v2300 = vand.u32 %v2030, 4294901760
    %v2301 = vsub.f32 %v2030, %v2300
    %v2302 = vand.u32 %v2301, 4294901760
    %v2303 = vsub.f32 %v2301, %v2302
    %v2304 = vand.u32 %v2303, 4294901760
    %2305 = vmatpush1.msra.mxu0 %v2304
    %2306 = vmatprep.subr.mxu0 0.0
    %v2307 = vand.u32 %v2031, 4294901760
    %v2308 = vsub.f32 %v2031, %v2307
    %v2309 = vand.u32 %v2308, 4294901760
    %v2310 = vsub.f32 %v2308, %v2309
    %v2311 = vand.u32 %v2310, 4294901760
    %2312 = vmatpush1.msra.mxu0 %v2311
    %2313 = vmatprep.subr.mxu0 0.0
    %2314 = vmatpush1.msra.mxu0 0.0
    %2315 = vmatprep.subr.mxu0 0.0
    %2316 = vmatpush1.msra.mxu0 0.0
    %2317 = vmatprep.subr.mxu0 0.0
    %2318 = vmatpush1.msra.mxu0 0.0
    %2319 = vmatprep.subr.mxu0 0.0
    %2320 = vmatpush1.msra.mxu0 0.0
    %2321 = vmatprep.subr.mxu0 0.0
    %2322 = vmatpush1.msra.mxu0 0.0
    %2323 = vmatprep.subr.mxu0 0.0
    %2324 = vmatpush1.msra.mxu0 0.0
    %2325 = vmatprep.subr.mxu0 0.0
    %2326 = vmatpush1.msra.mxu0 0.0
    %2327 = vmatprep.subr.mxu0 0.0
    %2328 = vmatpush1.msra.mxu0 0.0
    %2329 = vmatprep.subr.mxu0 0.0
    %2330 = vmatpush1.msra.mxu0 0.0
    %2331 = vmatprep.subr.mxu0 0.0
    %2332 = vmatpush1.msra.mxu0 0.0
    %2333 = vmatprep.subr.mxu0 0.0
    %2334 = vmatpush1.msra.mxu0 0.0
    %2335 = vmatprep.subr.mxu0 0.0
    %2336 = vmatpush1.msra.mxu0 0.0
    %2337 = vmatprep.subr.mxu0 0.0
    %2338 = vmatpush1.msra.mxu0 0.0
    %2339 = vmatprep.subr.mxu0 0.0
    %2340 = vmatpush1.msra.mxu0 0.0
    %2341 = vmatprep.subr.mxu0 0.0
    %2342 = vmatpush1.msra.mxu0 0.0
    %2343 = vmatprep.subr.mxu0 0.0
    %2344 = vmatpush1.msra.mxu0 0.0
    %2345 = vmatprep.mubr.f32.mxu0 0.0
    %v2346 = vand.u32 %v2007, 4294901760
    %2347 = vmatmul.mubr.f32.gmra.mrb[0].mxu0 %v2346
    %v2348 = vpop.f32.mrb[0].mxu0
    %v2349 = vadd.f32 %v2128, %v2348
    %v2350 = vpop.f32.mrb[0].mxu0
    %2351 = vmatprep.mubr.f32.mxu0 0.0
    %v2352 = vand.u32 %v2008, 4294901760
    %2353 = vmatmul.mubr.f32.gmra.mrb[0].mxu0 %v2352
    %v2354 = vpop.f32.mrb[0].mxu0
    %v2355 = vadd.f32 %v2138, %v2354
    %v2356 = vpop.f32.mrb[0].mxu0
    %2357 = vmatprep.mubr.f32.mxu0 0.0
    %v2358 = vand.u32 %v2009, 4294901760
    %2359 = vmatmul.mubr.f32.gmra.mrb[0].mxu0 %v2358
    %v2360 = vpop.f32.mrb[0].mxu0
    %v2361 = vadd.f32 %v2148, %v2360
    %v2362 = vpop.f32.mrb[0].mxu0
    %2363 = vmatprep.mubr.f32.mxu0 0.0
    %v2364 = vand.u32 %v2010, 4294901760
    %2365 = vmatmul.mubr.f32.gmra.mrb[0].mxu0 %v2364
    %v2366 = vpop.f32.mrb[0].mxu0
    %v2367 = vadd.f32 %v2158, %v2366
    %v2368 = vpop.f32.mrb[0].mxu0
    %2369 = vmatprep.mubr.f32.mxu0 0.0
    %v2370 = vand.u32 %v2011, 4294901760
    %2371 = vmatmul.mubr.f32.gmra.mrb[0].mxu0 %v2370
    %v2372 = vpop.f32.mrb[0].mxu0
    %v2373 = vadd.f32 %v2168, %v2372
    %v2374 = vpop.f32.mrb[0].mxu0
    %2375 = vmatprep.mubr.f32.mxu0 0.0
    %v2376 = vand.u32 %v2012, 4294901760
    %2377 = vmatmul.mubr.f32.gmra.mrb[0].mxu0 %v2376
    %v2378 = vpop.f32.mrb[0].mxu0
    %v2379 = vadd.f32 %v2178, %v2378
    %v2380 = vpop.f32.mrb[0].mxu0
    %2381 = vmatprep.mubr.f32.mxu0 0.0
    %v2382 = vand.u32 %v2013, 4294901760
    %2383 = vmatmul.mubr.f32.gmra.mrb[0].mxu0 %v2382
    %v2384 = vpop.f32.mrb[0].mxu0
    %v2385 = vadd.f32 %v2188, %v2384
    %v2386 = vpop.f32.mrb[0].mxu0
    %2387 = vmatprep.mubr.f32.mxu0 0.0
    %v2388 = vand.u32 %v2014, 4294901760
    %2389 = vmatmul.mubr.f32.gmra.mrb[0].mxu0 %v2388
    %v2390 = vpop.f32.mrb[0].mxu0
    %v2391 = vadd.f32 %v2198, %v2390
    %v2392 = vpop.f32.mrb[0].mxu0
    %2393 = vdwg.mxu0
    %2394 = vmatprep.subr.mxu0 0.0
    %v2395 = vand.u32 %v2016, 4294901760
    %v2396 = vsub.f32 %v2016, %v2395
    %2397 = vmatpush1.msra.mxu0 %v2396
    %2398 = vmatprep.subr.mxu0 0.0
    %v2399 = vand.u32 %v2017, 4294901760
    %v2400 = vsub.f32 %v2017, %v2399
    %2401 = vmatpush1.msra.mxu0 %v2400
    %2402 = vmatprep.subr.mxu0 0.0
    %v2403 = vand.u32 %v2018, 4294901760
    %v2404 = vsub.f32 %v2018, %v2403
    %2405 = vmatpush1.msra.mxu0 %v2404
    %2406 = vmatprep.subr.mxu0 0.0
    %v2407 = vand.u32 %v2019, 4294901760
    %v2408 = vsub.f32 %v2019, %v2407
    %2409 = vmatpush1.msra.mxu0 %v2408
    %2410 = vmatprep.subr.mxu0 0.0
    %v2411 = vand.u32 %v2020, 4294901760
    %v2412 = vsub.f32 %v2020, %v2411
    %2413 = vmatpush1.msra.mxu0 %v2412
    %2414 = vmatprep.subr.mxu0 0.0
    %v2415 = vand.u32 %v2021, 4294901760
    %v2416 = vsub.f32 %v2021, %v2415
    %2417 = vmatpush1.msra.mxu0 %v2416
    %2418 = vmatprep.subr.mxu0 0.0
    %v2419 = vand.u32 %v2022, 4294901760
    %v2420 = vsub.f32 %v2022, %v2419
    %2421 = vmatpush1.msra.mxu0 %v2420
    %2422 = vmatprep.subr.mxu0 0.0
    %v2423 = vand.u32 %v2023, 4294901760
    %v2424 = vsub.f32 %v2023, %v2423
    %2425 = vmatpush1.msra.mxu0 %v2424
    %2426 = vmatprep.subr.mxu0 0.0
    %v2427 = vand.u32 %v2024, 4294901760
    %v2428 = vsub.f32 %v2024, %v2427
    %2429 = vmatpush1.msra.mxu0 %v2428
    %2430 = vmatprep.subr.mxu0 0.0
    %v2431 = vand.u32 %v2025, 4294901760
    %v2432 = vsub.f32 %v2025, %v2431
    %2433 = vmatpush1.msra.mxu0 %v2432
    %2434 = vmatprep.subr.mxu0 0.0
    %v2435 = vand.u32 %v2026, 4294901760
    %v2436 = vsub.f32 %v2026, %v2435
    %2437 = vmatpush1.msra.mxu0 %v2436
    %2438 = vmatprep.subr.mxu0 0.0
    %v2439 = vand.u32 %v2027, 4294901760
    %v2440 = vsub.f32 %v2027, %v2439
    %2441 = vmatpush1.msra.mxu0 %v2440
    %2442 = vmatprep.subr.mxu0 0.0
    %v2443 = vand.u32 %v2028, 4294901760
    %v2444 = vsub.f32 %v2028, %v2443
    %2445 = vmatpush1.msra.mxu0 %v2444
    %2446 = vmatprep.subr.mxu0 0.0
    %v2447 = vand.u32 %v2029, 4294901760
    %v2448 = vsub.f32 %v2029, %v2447
    %2449 = vmatpush1.msra.mxu0 %v2448
    %2450 = vmatprep.subr.mxu0 0.0
    %v2451 = vand.u32 %v2030, 4294901760
    %v2452 = vsub.f32 %v2030, %v2451
    %2453 = vmatpush1.msra.mxu0 %v2452
    %2454 = vmatprep.subr.mxu0 0.0
    %v2455 = vand.u32 %v2031, 4294901760
    %v2456 = vsub.f32 %v2031, %v2455
    %2457 = vmatpush1.msra.mxu0 %v2456
    %2458 = vmatprep.subr.mxu0 0.0
    %2459 = vmatpush1.msra.mxu0 0.0
    %2460 = vmatprep.subr.mxu0 0.0
    %2461 = vmatpush1.msra.mxu0 0.0
    %2462 = vmatprep.subr.mxu0 0.0
    %2463 = vmatpush1.msra.mxu0 0.0
    %2464 = vmatprep.subr.mxu0 0.0
    %2465 = vmatpush1.msra.mxu0 0.0
    %2466 = vmatprep.subr.mxu0 0.0
    %2467 = vmatpush1.msra.mxu0 0.0
    %2468 = vmatprep.subr.mxu0 0.0
    %2469 = vmatpush1.msra.mxu0 0.0
    %2470 = vmatprep.subr.mxu0 0.0
    %2471 = vmatpush1.msra.mxu0 0.0
    %2472 = vmatprep.subr.mxu0 0.0
    %2473 = vmatpush1.msra.mxu0 0.0
    %2474 = vmatprep.subr.mxu0 0.0
    %2475 = vmatpush1.msra.mxu0 0.0
    %2476 = vmatprep.subr.mxu0 0.0
    %2477 = vmatpush1.msra.mxu0 0.0
    %2478 = vmatprep.subr.mxu0 0.0
    %2479 = vmatpush1.msra.mxu0 0.0
    %2480 = vmatprep.subr.mxu0 0.0
    %2481 = vmatpush1.msra.mxu0 0.0
    %2482 = vmatprep.subr.mxu0 0.0
    %2483 = vmatpush1.msra.mxu0 0.0
    %2484 = vmatprep.subr.mxu0 0.0
    %2485 = vmatpush1.msra.mxu0 0.0
    %2486 = vmatprep.subr.mxu0 0.0
    %2487 = vmatpush1.msra.mxu0 0.0
    %2488 = vmatprep.subr.mxu0 0.0
    %2489 = vmatpush1.msra.mxu0 0.0
    %2490 = vmatprep.mubr.f32.mxu0 0.0
    %v2491 = vand.u32 %v2007, 4294901760
    %v2492 = vsub.f32 %v2007, %v2491
    %2493 = vmatmul.mubr.f32.gmra.mrb[0].mxu0 %v2492
    %v2494 = vpop.f32.mrb[0].mxu0
    %v2495 = vadd.f32 %v2349, %v2494
    %v2496 = vpop.f32.mrb[0].mxu0
    %2497 = vmatprep.mubr.f32.mxu0 0.0
    %v2498 = vand.u32 %v2008, 4294901760
    %v2499 = vsub.f32 %v2008, %v2498
    %2500 = vmatmul.mubr.f32.gmra.mrb[0].mxu0 %v2499
    %v2501 = vpop.f32.mrb[0].mxu0
    %v2502 = vadd.f32 %v2355, %v2501
    %v2503 = vpop.f32.mrb[0].mxu0
    %2504 = vmatprep.mubr.f32.mxu0 0.0
    %v2505 = vand.u32 %v2009, 4294901760
    %v2506 = vsub.f32 %v2009, %v2505
    %2507 = vmatmul.mubr.f32.gmra.mrb[0].mxu0 %v2506
    %v2508 = vpop.f32.mrb[0].mxu0
    %v2509 = vadd.f32 %v2361, %v2508
    %v2510 = vpop.f32.mrb[0].mxu0
    %2511 = vmatprep.mubr.f32.mxu0 0.0
    %v2512 = vand.u32 %v2010, 4294901760
    %v2513 = vsub.f32 %v2010, %v2512
    %2514 = vmatmul.mubr.f32.gmra.mrb[0].mxu0 %v2513
    %v2515 = vpop.f32.mrb[0].mxu0
    %v2516 = vadd.f32 %v2367, %v2515
    %v2517 = vpop.f32.mrb[0].mxu0
    %2518 = vmatprep.mubr.f32.mxu0 0.0
    %v2519 = vand.u32 %v2011, 4294901760
    %v2520 = vsub.f32 %v2011, %v2519
    %2521 = vmatmul.mubr.f32.gmra.mrb[0].mxu0 %v2520
    %v2522 = vpop.f32.mrb[0].mxu0
    %v2523 = vadd.f32 %v2373, %v2522
    %v2524 = vpop.f32.mrb[0].mxu0
    %2525 = vmatprep.mubr.f32.mxu0 0.0
    %v2526 = vand.u32 %v2012, 4294901760
    %v2527 = vsub.f32 %v2012, %v2526
    %2528 = vmatmul.mubr.f32.gmra.mrb[0].mxu0 %v2527
    %v2529 = vpop.f32.mrb[0].mxu0
    %v2530 = vadd.f32 %v2379, %v2529
    %v2531 = vpop.f32.mrb[0].mxu0
    %2532 = vmatprep.mubr.f32.mxu0 0.0
    %v2533 = vand.u32 %v2013, 4294901760
    %v2534 = vsub.f32 %v2013, %v2533
    %2535 = vmatmul.mubr.f32.gmra.mrb[0].mxu0 %v2534
    %v2536 = vpop.f32.mrb[0].mxu0
    %v2537 = vadd.f32 %v2385, %v2536
    %v2538 = vpop.f32.mrb[0].mxu0
    %2539 = vmatprep.mubr.f32.mxu0 0.0
    %v2540 = vand.u32 %v2014, 4294901760
    %v2541 = vsub.f32 %v2014, %v2540
    %2542 = vmatmul.mubr.f32.gmra.mrb[0].mxu0 %v2541
    %v2543 = vpop.f32.mrb[0].mxu0
    %v2544 = vadd.f32 %v2391, %v2543
    %v2545 = vpop.f32.mrb[0].mxu0
    %2546 = vdwg.mxu0
    %2547 = vmatprep.subr.mxu0 0.0
    %v2548 = vand.u32 %v2016, 4294901760
    %2549 = vmatpush1.msra.mxu0 %v2548
    %2550 = vmatprep.subr.mxu0 0.0
    %v2551 = vand.u32 %v2017, 4294901760
    %2552 = vmatpush1.msra.mxu0 %v2551
    %2553 = vmatprep.subr.mxu0 0.0
    %v2554 = vand.u32 %v2018, 4294901760
    %2555 = vmatpush1.msra.mxu0 %v2554
    %2556 = vmatprep.subr.mxu0 0.0
    %v2557 = vand.u32 %v2019, 4294901760
    %2558 = vmatpush1.msra.mxu0 %v2557
    %2559 = vmatprep.subr.mxu0 0.0
    %v2560 = vand.u32 %v2020, 4294901760
    %2561 = vmatpush1.msra.mxu0 %v2560
    %2562 = vmatprep.subr.mxu0 0.0
    %v2563 = vand.u32 %v2021, 4294901760
    %2564 = vmatpush1.msra.mxu0 %v2563
    %2565 = vmatprep.subr.mxu0 0.0
    %v2566 = vand.u32 %v2022, 4294901760
    %2567 = vmatpush1.msra.mxu0 %v2566
    %2568 = vmatprep.subr.mxu0 0.0
    %v2569 = vand.u32 %v2023, 4294901760
    %2570 = vmatpush1.msra.mxu0 %v2569
    %2571 = vmatprep.subr.mxu0 0.0
    %v2572 = vand.u32 %v2024, 4294901760
    %2573 = vmatpush1.msra.mxu0 %v2572
    %2574 = vmatprep.subr.mxu0 0.0
    %v2575 = vand.u32 %v2025, 4294901760
    %2576 = vmatpush1.msra.mxu0 %v2575
    %2577 = vmatprep.subr.mxu0 0.0
    %v2578 = vand.u32 %v2026, 4294901760
    %2579 = vmatpush1.msra.mxu0 %v2578
    %2580 = vmatprep.subr.mxu0 0.0
    %v2581 = vand.u32 %v2027, 4294901760
    %2582 = vmatpush1.msra.mxu0 %v2581
    %2583 = vmatprep.subr.mxu0 0.0
    %v2584 = vand.u32 %v2028, 4294901760
    %2585 = vmatpush1.msra.mxu0 %v2584
    %2586 = vmatprep.subr.mxu0 0.0
    %v2587 = vand.u32 %v2029, 4294901760
    %2588 = vmatpush1.msra.mxu0 %v2587
    %2589 = vmatprep.subr.mxu0 0.0
    %v2590 = vand.u32 %v2030, 4294901760
    %2591 = vmatpush1.msra.mxu0 %v2590
    %2592 = vmatprep.subr.mxu0 0.0
    %v2593 = vand.u32 %v2031, 4294901760
    %2594 = vmatpush1.msra.mxu0 %v2593
    %2595 = vmatprep.subr.mxu0 0.0
    %2596 = vmatpush1.msra.mxu0 0.0
    %2597 = vmatprep.subr.mxu0 0.0
    %2598 = vmatpush1.msra.mxu0 0.0
    %2599 = vmatprep.subr.mxu0 0.0
    %2600 = vmatpush1.msra.mxu0 0.0
    %2601 = vmatprep.subr.mxu0 0.0
    %2602 = vmatpush1.msra.mxu0 0.0
    %2603 = vmatprep.subr.mxu0 0.0
    %2604 = vmatpush1.msra.mxu0 0.0
    %2605 = vmatprep.subr.mxu0 0.0
    %2606 = vmatpush1.msra.mxu0 0.0
    %2607 = vmatprep.subr.mxu0 0.0
    %2608 = vmatpush1.msra.mxu0 0.0
    %2609 = vmatprep.subr.mxu0 0.0
    %2610 = vmatpush1.msra.mxu0 0.0
    %2611 = vmatprep.subr.mxu0 0.0
    %2612 = vmatpush1.msra.mxu0 0.0
    %2613 = vmatprep.subr.mxu0 0.0
    %2614 = vmatpush1.msra.mxu0 0.0
    %2615 = vmatprep.subr.mxu0 0.0
    %2616 = vmatpush1.msra.mxu0 0.0
    %2617 = vmatprep.subr.mxu0 0.0
    %2618 = vmatpush1.msra.mxu0 0.0
    %2619 = vmatprep.subr.mxu0 0.0
    %2620 = vmatpush1.msra.mxu0 0.0
    %2621 = vmatprep.subr.mxu0 0.0
    %2622 = vmatpush1.msra.mxu0 0.0
    %2623 = vmatprep.subr.mxu0 0.0
    %2624 = vmatpush1.msra.mxu0 0.0
    %2625 = vmatprep.subr.mxu0 0.0
    %2626 = vmatpush1.msra.mxu0 0.0
    %2627 = vmatprep.mubr.f32.mxu0 0.0
    %v2628 = vand.u32 %v2007, 4294901760
    %v2629 = vsub.f32 %v2007, %v2628
    %v2630 = vand.u32 %v2629, 4294901760
    %2631 = vmatmul.mubr.f32.gmra.mrb[0].mxu0 %v2630
    %v2632 = vpop.f32.mrb[0].mxu0
    %v2633 = vadd.f32 %v2495, %v2632
    %v2634 = vpop.f32.mrb[0].mxu0
    %2635 = vmatprep.mubr.f32.mxu0 0.0
    %v2636 = vand.u32 %v2008, 4294901760
    %v2637 = vsub.f32 %v2008, %v2636
    %v2638 = vand.u32 %v2637, 4294901760
    %2639 = vmatmul.mubr.f32.gmra.mrb[0].mxu0 %v2638
    %v2640 = vpop.f32.mrb[0].mxu0
    %v2641 = vadd.f32 %v2502, %v2640
    %v2642 = vpop.f32.mrb[0].mxu0
    %2643 = vmatprep.mubr.f32.mxu0 0.0
    %v2644 = vand.u32 %v2009, 4294901760
    %v2645 = vsub.f32 %v2009, %v2644
    %v2646 = vand.u32 %v2645, 4294901760
    %2647 = vmatmul.mubr.f32.gmra.mrb[0].mxu0 %v2646
    %v2648 = vpop.f32.mrb[0].mxu0
    %v2649 = vadd.f32 %v2509, %v2648
    %v2650 = vpop.f32.mrb[0].mxu0
    %2651 = vmatprep.mubr.f32.mxu0 0.0
    %v2652 = vand.u32 %v2010, 4294901760
    %v2653 = vsub.f32 %v2010, %v2652
    %v2654 = vand.u32 %v2653, 4294901760
    %2655 = vmatmul.mubr.f32.gmra.mrb[0].mxu0 %v2654
    %v2656 = vpop.f32.mrb[0].mxu0
    %v2657 = vadd.f32 %v2516, %v2656
    %v2658 = vpop.f32.mrb[0].mxu0
    %2659 = vmatprep.mubr.f32.mxu0 0.0
    %v2660 = vand.u32 %v2011, 4294901760
    %v2661 = vsub.f32 %v2011, %v2660
    %v2662 = vand.u32 %v2661, 4294901760
    %2663 = vmatmul.mubr.f32.gmra.mrb[0].mxu0 %v2662
    %v2664 = vpop.f32.mrb[0].mxu0
    %v2665 = vadd.f32 %v2523, %v2664
    %v2666 = vpop.f32.mrb[0].mxu0
    %2667 = vmatprep.mubr.f32.mxu0 0.0
    %v2668 = vand.u32 %v2012, 4294901760
    %v2669 = vsub.f32 %v2012, %v2668
    %v2670 = vand.u32 %v2669, 4294901760
    %2671 = vmatmul.mubr.f32.gmra.mrb[0].mxu0 %v2670
    %v2672 = vpop.f32.mrb[0].mxu0
    %v2673 = vadd.f32 %v2530, %v2672
    %v2674 = vpop.f32.mrb[0].mxu0
    %2675 = vmatprep.mubr.f32.mxu0 0.0
    %v2676 = vand.u32 %v2013, 4294901760
    %v2677 = vsub.f32 %v2013, %v2676
    %v2678 = vand.u32 %v2677, 4294901760
    %2679 = vmatmul.mubr.f32.gmra.mrb[0].mxu0 %v2678
    %v2680 = vpop.f32.mrb[0].mxu0
    %v2681 = vadd.f32 %v2537, %v2680
    %v2682 = vpop.f32.mrb[0].mxu0
    %2683 = vmatprep.mubr.f32.mxu0 0.0
    %v2684 = vand.u32 %v2014, 4294901760
    %v2685 = vsub.f32 %v2014, %v2684
    %v2686 = vand.u32 %v2685, 4294901760
    %2687 = vmatmul.mubr.f32.gmra.mrb[0].mxu0 %v2686
    %v2688 = vpop.f32.mrb[0].mxu0
    %v2689 = vadd.f32 %v2544, %v2688
    %v2690 = vpop.f32.mrb[0].mxu0
    %2691 = vdwg.mxu0
    %2692 = vmatprep.subr.mxu0 0.0
    %v2693 = vand.u32 %v2016, 4294901760
    %v2694 = vsub.f32 %v2016, %v2693
    %v2695 = vand.u32 %v2694, 4294901760
    %2696 = vmatpush1.msra.mxu0 %v2695
    %2697 = vmatprep.subr.mxu0 0.0
    %v2698 = vand.u32 %v2017, 4294901760
    %v2699 = vsub.f32 %v2017, %v2698
    %v2700 = vand.u32 %v2699, 4294901760
    %2701 = vmatpush1.msra.mxu0 %v2700
    %2702 = vmatprep.subr.mxu0 0.0
    %v2703 = vand.u32 %v2018, 4294901760
    %v2704 = vsub.f32 %v2018, %v2703
    %v2705 = vand.u32 %v2704, 4294901760
    %2706 = vmatpush1.msra.mxu0 %v2705
    %2707 = vmatprep.subr.mxu0 0.0
    %v2708 = vand.u32 %v2019, 4294901760
    %v2709 = vsub.f32 %v2019, %v2708
    %v2710 = vand.u32 %v2709, 4294901760
    %2711 = vmatpush1.msra.mxu0 %v2710
    %2712 = vmatprep.subr.mxu0 0.0
    %v2713 = vand.u32 %v2020, 4294901760
    %v2714 = vsub.f32 %v2020, %v2713
    %v2715 = vand.u32 %v2714, 4294901760
    %2716 = vmatpush1.msra.mxu0 %v2715
    %2717 = vmatprep.subr.mxu0 0.0
    %v2718 = vand.u32 %v2021, 4294901760
    %v2719 = vsub.f32 %v2021, %v2718
    %v2720 = vand.u32 %v2719, 4294901760
    %2721 = vmatpush1.msra.mxu0 %v2720
    %2722 = vmatprep.subr.mxu0 0.0
    %v2723 = vand.u32 %v2022, 4294901760
    %v2724 = vsub.f32 %v2022, %v2723
    %v2725 = vand.u32 %v2724, 4294901760
    %2726 = vmatpush1.msra.mxu0 %v2725
    %2727 = vmatprep.subr.mxu0 0.0
    %v2728 = vand.u32 %v2023, 4294901760
    %v2729 = vsub.f32 %v2023, %v2728
    %v2730 = vand.u32 %v2729, 4294901760
    %2731 = vmatpush1.msra.mxu0 %v2730
    %2732 = vmatprep.subr.mxu0 0.0
    %v2733 = vand.u32 %v2024, 4294901760
    %v2734 = vsub.f32 %v2024, %v2733
    %v2735 = vand.u32 %v2734, 4294901760
    %2736 = vmatpush1.msra.mxu0 %v2735
    %2737 = vmatprep.subr.mxu0 0.0
    %v2738 = vand.u32 %v2025, 4294901760
    %v2739 = vsub.f32 %v2025, %v2738
    %v2740 = vand.u32 %v2739, 4294901760
    %2741 = vmatpush1.msra.mxu0 %v2740
    %2742 = vmatprep.subr.mxu0 0.0
    %v2743 = vand.u32 %v2026, 4294901760
    %v2744 = vsub.f32 %v2026, %v2743
    %v2745 = vand.u32 %v2744, 4294901760
    %2746 = vmatpush1.msra.mxu0 %v2745
    %2747 = vmatprep.subr.mxu0 0.0
    %v2748 = vand.u32 %v2027, 4294901760
    %v2749 = vsub.f32 %v2027, %v2748
    %v2750 = vand.u32 %v2749, 4294901760
    %2751 = vmatpush1.msra.mxu0 %v2750
    %2752 = vmatprep.subr.mxu0 0.0
    %v2753 = vand.u32 %v2028, 4294901760
    %v2754 = vsub.f32 %v2028, %v2753
    %v2755 = vand.u32 %v2754, 4294901760
    %2756 = vmatpush1.msra.mxu0 %v2755
    %2757 = vmatprep.subr.mxu0 0.0
    %v2758 = vand.u32 %v2029, 4294901760
    %v2759 = vsub.f32 %v2029, %v2758
    %v2760 = vand.u32 %v2759, 4294901760
    %2761 = vmatpush1.msra.mxu0 %v2760
    %2762 = vmatprep.subr.mxu0 0.0
    %v2763 = vand.u32 %v2030, 4294901760
    %v2764 = vsub.f32 %v2030, %v2763
    %v2765 = vand.u32 %v2764, 4294901760
    %2766 = vmatpush1.msra.mxu0 %v2765
    %2767 = vmatprep.subr.mxu0 0.0
    %v2768 = vand.u32 %v2031, 4294901760
    %v2769 = vsub.f32 %v2031, %v2768
    %v2770 = vand.u32 %v2769, 4294901760
    %2771 = vmatpush1.msra.mxu0 %v2770
    %2772 = vmatprep.subr.mxu0 0.0
    %2773 = vmatpush1.msra.mxu0 0.0
    %2774 = vmatprep.subr.mxu0 0.0
    %2775 = vmatpush1.msra.mxu0 0.0
    %2776 = vmatprep.subr.mxu0 0.0
    %2777 = vmatpush1.msra.mxu0 0.0
    %2778 = vmatprep.subr.mxu0 0.0
    %2779 = vmatpush1.msra.mxu0 0.0
    %2780 = vmatprep.subr.mxu0 0.0
    %2781 = vmatpush1.msra.mxu0 0.0
    %2782 = vmatprep.subr.mxu0 0.0
    %2783 = vmatpush1.msra.mxu0 0.0
    %2784 = vmatprep.subr.mxu0 0.0
    %2785 = vmatpush1.msra.mxu0 0.0
    %2786 = vmatprep.subr.mxu0 0.0
    %2787 = vmatpush1.msra.mxu0 0.0
    %2788 = vmatprep.subr.mxu0 0.0
    %2789 = vmatpush1.msra.mxu0 0.0
    %2790 = vmatprep.subr.mxu0 0.0
    %2791 = vmatpush1.msra.mxu0 0.0
    %2792 = vmatprep.subr.mxu0 0.0
    %2793 = vmatpush1.msra.mxu0 0.0
    %2794 = vmatprep.subr.mxu0 0.0
    %2795 = vmatpush1.msra.mxu0 0.0
    %2796 = vmatprep.subr.mxu0 0.0
    %2797 = vmatpush1.msra.mxu0 0.0
    %2798 = vmatprep.subr.mxu0 0.0
    %2799 = vmatpush1.msra.mxu0 0.0
    %2800 = vmatprep.subr.mxu0 0.0
    %2801 = vmatpush1.msra.mxu0 0.0
    %2802 = vmatprep.subr.mxu0 0.0
    %2803 = vmatpush1.msra.mxu0 0.0
    %2804 = vmatprep.mubr.f32.mxu0 0.0
    %v2805 = vand.u32 %v2007, 4294901760
    %2806 = vmatmul.mubr.f32.gmra.mrb[0].mxu0 %v2805
    %v2807 = vpop.f32.mrb[0].mxu0
    %v2808 = vadd.f32 %v2633, %v2807
    %v2809 = vpop.f32.mrb[0].mxu0
    %2810 = vmatprep.mubr.f32.mxu0 0.0
    %v2811 = vand.u32 %v2008, 4294901760
    %2812 = vmatmul.mubr.f32.gmra.mrb[0].mxu0 %v2811
    %v2813 = vpop.f32.mrb[0].mxu0
    %v2814 = vadd.f32 %v2641, %v2813
    %v2815 = vpop.f32.mrb[0].mxu0
    %2816 = vmatprep.mubr.f32.mxu0 0.0
    %v2817 = vand.u32 %v2009, 4294901760
    %2818 = vmatmul.mubr.f32.gmra.mrb[0].mxu0 %v2817
    %v2819 = vpop.f32.mrb[0].mxu0
    %v2820 = vadd.f32 %v2649, %v2819
    %v2821 = vpop.f32.mrb[0].mxu0
    %2822 = vmatprep.mubr.f32.mxu0 0.0
    %v2823 = vand.u32 %v2010, 4294901760
    %2824 = vmatmul.mubr.f32.gmra.mrb[0].mxu0 %v2823
    %v2825 = vpop.f32.mrb[0].mxu0
    %v2826 = vadd.f32 %v2657, %v2825
    %v2827 = vpop.f32.mrb[0].mxu0
    %2828 = vmatprep.mubr.f32.mxu0 0.0
    %v2829 = vand.u32 %v2011, 4294901760
    %2830 = vmatmul.mubr.f32.gmra.mrb[0].mxu0 %v2829
    %v2831 = vpop.f32.mrb[0].mxu0
    %v2832 = vadd.f32 %v2665, %v2831
    %v2833 = vpop.f32.mrb[0].mxu0
    %2834 = vmatprep.mubr.f32.mxu0 0.0
    %v2835 = vand.u32 %v2012, 4294901760
    %2836 = vmatmul.mubr.f32.gmra.mrb[0].mxu0 %v2835
    %v2837 = vpop.f32.mrb[0].mxu0
    %v2838 = vadd.f32 %v2673, %v2837
    %v2839 = vpop.f32.mrb[0].mxu0
    %2840 = vmatprep.mubr.f32.mxu0 0.0
    %v2841 = vand.u32 %v2013, 4294901760
    %2842 = vmatmul.mubr.f32.gmra.mrb[0].mxu0 %v2841
    %v2843 = vpop.f32.mrb[0].mxu0
    %v2844 = vadd.f32 %v2681, %v2843
    %v2845 = vpop.f32.mrb[0].mxu0
    %2846 = vmatprep.mubr.f32.mxu0 0.0
    %v2847 = vand.u32 %v2014, 4294901760
    %2848 = vmatmul.mubr.f32.gmra.mrb[0].mxu0 %v2847
    %v2849 = vpop.f32.mrb[0].mxu0
    %v2850 = vadd.f32 %v2689, %v2849
    %v2851 = vpop.f32.mrb[0].mxu0
    %2852 = vdwg.mxu0
    %2853 = vmatprep.subr.mxu0 0.0
    %v2854 = vand.u32 %v2016, 4294901760
    %2855 = vmatpush1.msra.mxu0 %v2854
    %2856 = vmatprep.subr.mxu0 0.0
    %v2857 = vand.u32 %v2017, 4294901760
    %2858 = vmatpush1.msra.mxu0 %v2857
    %2859 = vmatprep.subr.mxu0 0.0
    %v2860 = vand.u32 %v2018, 4294901760
    %2861 = vmatpush1.msra.mxu0 %v2860
    %2862 = vmatprep.subr.mxu0 0.0
    %v2863 = vand.u32 %v2019, 4294901760
    %2864 = vmatpush1.msra.mxu0 %v2863
    %2865 = vmatprep.subr.mxu0 0.0
    %v2866 = vand.u32 %v2020, 4294901760
    %2867 = vmatpush1.msra.mxu0 %v2866
    %2868 = vmatprep.subr.mxu0 0.0
    %v2869 = vand.u32 %v2021, 4294901760
    %2870 = vmatpush1.msra.mxu0 %v2869
    %2871 = vmatprep.subr.mxu0 0.0
    %v2872 = vand.u32 %v2022, 4294901760
    %2873 = vmatpush1.msra.mxu0 %v2872
    %2874 = vmatprep.subr.mxu0 0.0
    %v2875 = vand.u32 %v2023, 4294901760
    %2876 = vmatpush1.msra.mxu0 %v2875
    %2877 = vmatprep.subr.mxu0 0.0
    %v2878 = vand.u32 %v2024, 4294901760
    %2879 = vmatpush1.msra.mxu0 %v2878
    %2880 = vmatprep.subr.mxu0 0.0
    %v2881 = vand.u32 %v2025, 4294901760
    %2882 = vmatpush1.msra.mxu0 %v2881
    %2883 = vmatprep.subr.mxu0 0.0
    %v2884 = vand.u32 %v2026, 4294901760
    %2885 = vmatpush1.msra.mxu0 %v2884
    %2886 = vmatprep.subr.mxu0 0.0
    %v2887 = vand.u32 %v2027, 4294901760
    %2888 = vmatpush1.msra.mxu0 %v2887
    %2889 = vmatprep.subr.mxu0 0.0
    %v2890 = vand.u32 %v2028, 4294901760
    %2891 = vmatpush1.msra.mxu0 %v2890
    %2892 = vmatprep.subr.mxu0 0.0
    %v2893 = vand.u32 %v2029, 4294901760
    %2894 = vmatpush1.msra.mxu0 %v2893
    %2895 = vmatprep.subr.mxu0 0.0
    %v2896 = vand.u32 %v2030, 4294901760
    %2897 = vmatpush1.msra.mxu0 %v2896
    %2898 = vmatprep.subr.mxu0 0.0
    %v2899 = vand.u32 %v2031, 4294901760
    %2900 = vmatpush1.msra.mxu0 %v2899
    %2901 = vmatprep.subr.mxu0 0.0
    %2902 = vmatpush1.msra.mxu0 0.0
    %2903 = vmatprep.subr.mxu0 0.0
    %2904 = vmatpush1.msra.mxu0 0.0
    %2905 = vmatprep.subr.mxu0 0.0
    %2906 = vmatpush1.msra.mxu0 0.0
    %2907 = vmatprep.subr.mxu0 0.0
    %2908 = vmatpush1.msra.mxu0 0.0
    %2909 = vmatprep.subr.mxu0 0.0
    %2910 = vmatpush1.msra.mxu0 0.0
    %2911 = vmatprep.subr.mxu0 0.0
    %2912 = vmatpush1.msra.mxu0 0.0
    %2913 = vmatprep.subr.mxu0 0.0
    %2914 = vmatpush1.msra.mxu0 0.0
    %2915 = vmatprep.subr.mxu0 0.0
    %2916 = vmatpush1.msra.mxu0 0.0
    %2917 = vmatprep.subr.mxu0 0.0
    %2918 = vmatpush1.msra.mxu0 0.0
    %2919 = vmatprep.subr.mxu0 0.0
    %2920 = vmatpush1.msra.mxu0 0.0
    %2921 = vmatprep.subr.mxu0 0.0
    %2922 = vmatpush1.msra.mxu0 0.0
    %2923 = vmatprep.subr.mxu0 0.0
    %2924 = vmatpush1.msra.mxu0 0.0
    %2925 = vmatprep.subr.mxu0 0.0
    %2926 = vmatpush1.msra.mxu0 0.0
    %2927 = vmatprep.subr.mxu0 0.0
    %2928 = vmatpush1.msra.mxu0 0.0
    %2929 = vmatprep.subr.mxu0 0.0
    %2930 = vmatpush1.msra.mxu0 0.0
    %2931 = vmatprep.subr.mxu0 0.0
    %2932 = vmatpush1.msra.mxu0 0.0
    %2933 = vmatprep.mubr.f32.mxu0 0.0
    %v2934 = vand.u32 %v2007, 4294901760
    %2935 = vmatmul.mubr.f32.gmra.mrb[0].mxu0 %v2934
    %v2936 = vpop.f32.mrb[0].mxu0
    %v2937 = vadd.f32 %v2808, %v2936
    %v2938 = vpop.f32.mrb[0].mxu0
    %2939 = vmatprep.mubr.f32.mxu0 0.0
    %v2940 = vand.u32 %v2008, 4294901760
    %2941 = vmatmul.mubr.f32.gmra.mrb[0].mxu0 %v2940
    %v2942 = vpop.f32.mrb[0].mxu0
    %v2943 = vadd.f32 %v2814, %v2942
    %v2944 = vpop.f32.mrb[0].mxu0
    %2945 = vmatprep.mubr.f32.mxu0 0.0
    %v2946 = vand.u32 %v2009, 4294901760
    %2947 = vmatmul.mubr.f32.gmra.mrb[0].mxu0 %v2946
    %v2948 = vpop.f32.mrb[0].mxu0
    %v2949 = vadd.f32 %v2820, %v2948
    %v2950 = vpop.f32.mrb[0].mxu0
    %2951 = vmatprep.mubr.f32.mxu0 0.0
    %v2952 = vand.u32 %v2010, 4294901760
    %2953 = vmatmul.mubr.f32.gmra.mrb[0].mxu0 %v2952
    %v2954 = vpop.f32.mrb[0].mxu0
    %v2955 = vadd.f32 %v2826, %v2954
    %v2956 = vpop.f32.mrb[0].mxu0
    %2957 = vmatprep.mubr.f32.mxu0 0.0
    %v2958 = vand.u32 %v2011, 4294901760
    %2959 = vmatmul.mubr.f32.gmra.mrb[0].mxu0 %v2958
    %v2960 = vpop.f32.mrb[0].mxu0
    %v2961 = vadd.f32 %v2832, %v2960
    %v2962 = vpop.f32.mrb[0].mxu0
    %2963 = vmatprep.mubr.f32.mxu0 0.0
    %v2964 = vand.u32 %v2012, 4294901760
    %2965 = vmatmul.mubr.f32.gmra.mrb[0].mxu0 %v2964
    %v2966 = vpop.f32.mrb[0].mxu0
    %v2967 = vadd.f32 %v2838, %v2966
    %v2968 = vpop.f32.mrb[0].mxu0
    %2969 = vmatprep.mubr.f32.mxu0 0.0
    %v2970 = vand.u32 %v2013, 4294901760
    %2971 = vmatmul.mubr.f32.gmra.mrb[0].mxu0 %v2970
    %v2972 = vpop.f32.mrb[0].mxu0
    %v2973 = vadd.f32 %v2844, %v2972
    %v2974 = vpop.f32.mrb[0].mxu0
    %2975 = vmatprep.mubr.f32.mxu0 0.0
    %v2976 = vand.u32 %v2014, 4294901760
    %2977 = vmatmul.mubr.f32.gmra.mrb[0].mxu0 %v2976
    %v2978 = vpop.f32.mrb[0].mxu0
    %v2979 = vadd.f32 %v2850, %v2978
    %v2980 = vpop.f32.mrb[0].mxu0
    %2981 = vdwg.mxu0
    %v2982 = vmul.f32 %v43, %v2937
    %v2983 = vmul.f32 %v44, %v2943
    %v2984 = vmul.f32 %v45, %v2949
    %v2985 = vmul.f32 %v46, %v2955
    %v2986 = vmul.f32 %v47, %v2961
    %v2987 = vmul.f32 %v48, %v2967
    %v2988 = vmul.f32 %v49, %v2973
    %v2989 = vmul.f32 %v50, %v2979
    %v2990 = vadd.f32 %v2982, %v2007
    %v2991 = vadd.f32 %v2983, %v2008
    %v2992 = vadd.f32 %v2984, %v2009
    %v2993 = vadd.f32 %v2985, %v2010
    %v2994 = vadd.f32 %v2986, %v2011
    %v2995 = vadd.f32 %v2987, %v2012
    %v2996 = vadd.f32 %v2988, %v2013
    %v2997 = vadd.f32 %v2989, %v2014
    %2998 = vst [vmem:[#allocation7] sm:$0xff] %v2990
    %2999 = vst [vmem:[#allocation7 + $0x8] sm:$0xff] %v2991
    %3000 = vst [vmem:[#allocation7 + $0x10] sm:$0xff] %v2992
    %3001 = vst [vmem:[#allocation7 + $0x18] sm:$0xff] %v2993
    %3002 = vst [vmem:[#allocation7 + $0x20] sm:$0xff] %v2994
    %3003 = vst [vmem:[#allocation7 + $0x28] sm:$0xff] %v2995
    %3004 = vst [vmem:[#allocation7 + $0x30] sm:$0xff] %v2996
    %3005 = vst [vmem:[#allocation7 + $0x38] sm:$0xff] %v2997
    // Predicated region
    $region22: #{tpu_custom_call.1} parent=1 // pred_check
      _
    $region23: #{tpu_custom_call.1} parent=1 // pred_check_branch
      %3007 = sbr.rel (0) target = $region25
    $region24: #{tpu_custom_call.1} parent=1 // pred_region
      %s3009 = ssub.s32 1024, 1024
      %3010 = vsyncadd [#allocation4], %s3009
      %s3011 = sshll.u32 [#allocation7], 4
      %s3012 = int_to_ptr.vmem [resolvable:$true] %s3011
      %3017 = dma.vmem_to_hbm [thread:$0]  %s3012, 1024, %s3, [#allocation4], 128, 128, 8
    $region25: #{tpu_custom_call.1} parent=1 // pred_fallthru
      _
    // Predicated region
    $region26: #{tpu_custom_call.1} parent=1 // pred_check
      _
    $region27: #{tpu_custom_call.1} parent=1 // pred_check_branch
      %3019 = sbr.rel (0) target = $region29
    $region28: #{tpu_custom_call.1} parent=1 // pred_region
      %3020 = dma.done [#allocation4], 1024
    $region29: #{tpu_custom_call.1} parent=1 // pred_fallthru
      _
    %3021 = vsyncpa [#allocation3], 1
    %3022 = vsyncpa [#allocation6], 1
    %3023 = vsyncpa [#allocation4], 1

</llo_original>
